<compile_context>
chip_gen: v5e
topology: v5e:2x2
jax: 0.10.0
libtpu: 0.0.40
codegen_flags: <defaults>
</compile_context>

<pallas_src>
import functools

import numpy as np
import jax
import jax.numpy as jnp
from jax.experimental import pallas as pl
from jax.experimental.pallas import tpu as pltpu


def _formula_kernel(w_ref, x_ref, o_ref, *, C, m, lane, n_chunks):
    """One batch tile per grid step.

    w_ref : SMEM (12*(C+1),)            softmaxed attention scores n1..n6,d1..d6 (flattened)
    x_ref : VMEM (n_chunks, C, m, lane)  context panels, lane axis = folded (batch, k)
    o_ref : VMEM (n_chunks, m, lane)     output in the same folded layout
    """
    C1 = C + 1

    # Hoist all scalar weight reads (SMEM) once per grid step; reused across the tile.
    w = [[w_ref[r * C1 + c] for c in range(C1)] for r in range(12)]

    # Identity-panel mask: 1.0 at intra-block position 0 (sublane 0), for every lane.
    delta0 = (jax.lax.broadcasted_iota(jnp.int32, (m, lane), 0) == 0).astype(jnp.float32)

    def circ_conv(a, b):
        # blockwise circular convolution: out[j] = sum_i a[i] * b[(j - i) % m]
        out = a[0:1, :] * b
        for i in range(1, m):
            out = out + a[i:i + 1, :] * pltpu.roll(b, shift=i, axis=0)
        return out

    def circ_corr(a, b):
        # blockwise circular correlation (unbind a by b): out[j] = sum_i b[i] * a[(j + i) % m]
        out = b[0:1, :] * a
        for i in range(1, m):
            out = out + b[i:i + 1, :] * pltpu.roll(a, shift=m - i, axis=0)
        return out

    @pl.loop(0, n_chunks)
    def _(ci):
        xc = x_ref[ci]                                    # (C, m, lane)

        # All 12 projections in one pass over the context panels (each panel read once).
        panel0 = xc[0]
        projs = [w[r][0] * panel0 for r in range(12)]
        for c in range(1, C):
            panel = xc[c]
            for r in range(12):
                projs[r] = projs[r] + w[r][c] * panel
        for r in range(12):                               # identity panel contribution
            projs[r] = projs[r] + w[r][C] * delta0

        num = circ_conv(circ_conv(circ_conv(projs[0], projs[1]),
                                  circ_conv(projs[2], projs[3])),
                        circ_conv(projs[4], projs[5]))
        den = circ_conv(circ_conv(circ_conv(projs[6], projs[7]),
                                  circ_conv(projs[8], projs[9])),
                        circ_conv(projs[10], projs[11]))

        o_ref[ci] = circ_corr(num, den).astype(o_ref.dtype)


def extended_formula_forward(x, ctx, params, k, T=1.0, lane_chunk=256, chunks_per_step=32):
    """x: (B, examples_len, d_vsa), ctx: (B, context_len, d_vsa),
    params: list of 12 vectors [n1..n6, d1..d6], each of shape (examples+context+1,)."""
    B, E, D = x.shape
    Cc = ctx.shape[1]
    C = E + Cc
    C1 = C + 1
    assert D % k == 0
    m = D // k
    assert len(params) == 12 and all(p.shape == (C1,) for p in params)
    assert lane_chunk % 128 == 0

    # ---- glue: softmax(weights / T), flattened for 1-D SMEM (avoids 2-D SMEM padding)
    w = jax.nn.softmax(jnp.stack(params, axis=0).astype(jnp.float32) / T, axis=-1)  # (12, C1)
    w_flat = w.reshape(-1)

    # ---- glue: lane-dense relayout (host-side plumbing).  (B, C, k, m) -> rows = (b, k)
    # folded onto the lane axis, m on sublanes.  No identity panel materialized.
    xc = jnp.concatenate([x, ctx], axis=1).astype(jnp.float32)            # (B, C, D)
    xr = xc.reshape(B, C, k, m).transpose(0, 2, 1, 3).reshape(B * k, C, m)  # (B*k, C, m)

    rows = B * k
    cps = max(1, min(chunks_per_step, pl.cdiv(rows, lane_chunk)))         # chunks per grid step
    rows_per_step = lane_chunk * cps
    rows_p = pl.cdiv(rows, rows_per_step) * rows_per_step
    if rows_p != rows:
        xr = jnp.pad(xr, ((0, rows_p - rows), (0, 0), (0, 0)))
    nb = rows_p // lane_chunk
    grid = (nb // cps,)

    x_in = xr.reshape(nb, lane_chunk, C, m).transpose(0, 2, 3, 1)         # (nb, C, m, lane)

    kernel = functools.partial(_formula_kernel, C=C, m=m, lane=lane_chunk, n_chunks=cps)
    out = pl.pallas_call(
        kernel,
        out_shape=jax.ShapeDtypeStruct((nb, m, lane_chunk), jnp.float32),
        grid=grid,
        in_specs=[
            pl.BlockSpec(memory_space=pltpu.MemorySpace.SMEM),                # attention scores
            pl.BlockSpec((cps, C, m, lane_chunk), lambda g: (g, 0, 0, 0)),    # x batch tile
        ],
        out_specs=pl.BlockSpec((cps, m, lane_chunk), lambda g: (g, 0, 0)),
        compiler_params=pltpu.CompilerParams(dimension_semantics=("parallel",)),
    )(w_flat, x_in)

    # ---- glue: undo the relayout, drop the batch padding
    out = out.transpose(0, 2, 1).reshape(rows_p, m)[:rows]                # (B*k, m)
    return out.reshape(B, k * m)                                          # (B, D)


def _numpy_reference(x, ctx, params, k, T=1.0):
    """Pure numpy mirror of the torch forward (FFT-based HRR binding)."""
    xcat = np.concatenate([x, ctx], axis=1).astype(np.float64)
    B, C, D = xcat.shape
    m = D // k
    x4 = xcat.reshape(B, C, k, m)
    ident = np.zeros((B, 1, k, m), np.float64)
    ident[:, :, :, 0] = 1.0
    x4 = np.concatenate([x4, ident], axis=1)
    xf = x4.reshape(B, C + 1, D)

    p = np.asarray(params, np.float64) / T                                # (12, C+1)
    e = np.exp(p - p.max(axis=-1, keepdims=True))
    wt = e / e.sum(axis=-1, keepdims=True)
    proj = np.einsum("nc,bcd->bnd", wt, xf).reshape(B, 12, k, m)

    def conv(a, b):
        return np.real(np.fft.ifft(np.fft.fft(a, axis=-1) * np.fft.fft(b, axis=-1), axis=-1))

    def corr(a, b):
        return np.real(np.fft.ifft(np.fft.fft(a, axis=-1) * np.conj(np.fft.fft(b, axis=-1)), axis=-1))

    pr = [proj[:, i] for i in range(12)]
    n = conv(conv(conv(pr[0], pr[1]), conv(pr[2], pr[3])), conv(pr[4], pr[5]))
    d = conv(conv(conv(pr[6], pr[7]), conv(pr[8], pr[9])), conv(pr[10], pr[11]))
    return corr(n, d).reshape(B, D).astype(np.float32)


if __name__ == "__main__":
    # shapes consistent with the module: examples_len=2, context_len=5 (weight length 8),
    # k=4 VSA blocks, d_vsa=32 (block size m=8), batch=2
    B, E, Cc, k, d_vsa = 2, 2, 5, 4, 32
    key = jax.random.PRNGKey(0)
    kx, kc, kp = jax.random.split(key, 3)
    x = jax.random.normal(kx, (B, E, d_vsa), dtype=jnp.float32)
    ctx = jax.random.normal(kc, (B, Cc, d_vsa), dtype=jnp.float32)
    pmat = jax.random.normal(kp, (12, E + Cc + 1), dtype=jnp.float32)     # n1..n6, d1..d6
    params = [pmat[i] for i in range(12)]

    out = extended_formula_forward(x, ctx, params, k)
    out = jax.block_until_ready(out)
    assert out.shape == (B, d_vsa)

    ref = _numpy_reference(np.asarray(x), np.asarray(ctx), np.asarray(pmat), k)
    np.testing.assert_allclose(np.asarray(out), ref, rtol=2e-3, atol=1e-3)
    print("KERNEL_OK")
</pallas_src>

<mosaic_0001>
module attributes {stable_mosaic.version = 11 : i64} {
  func.func @_formula_kernel(%arg0: i32, %arg1: memref<96xf32, #tpu.memory_space<smem>>, %arg2: memref<1x7x8x256xf32, #tpu.memory_space<vmem>>, %arg3: memref<1x8x256xf32, #tpu.memory_space<vmem>>) attributes {dimension_semantics = [#tpu.dimension_semantics<parallel>], iteration_bounds = array<i64: 1>, scalar_prefetch = 0 : i64, scratch_operands = 0 : i64, tpu.core_type = #tpu.core_type<tc>, window_params = [{transform_indices = @transform_0, window_bounds = array<i64: 96>}, {transform_indices = @transform_1, window_bounds = array<i64: 1, 7, 8, 256>}, {transform_indices = @transform_2, window_bounds = array<i64: 1, 8, 256>}]} {
    %c0 = arith.constant 0 : index
    %0 = memref.load %arg1[%c0] : memref<96xf32, #tpu.memory_space<smem>>
    %c1 = arith.constant 1 : index
    %1 = memref.load %arg1[%c1] : memref<96xf32, #tpu.memory_space<smem>>
    %c2 = arith.constant 2 : index
    %2 = memref.load %arg1[%c2] : memref<96xf32, #tpu.memory_space<smem>>
    %c3 = arith.constant 3 : index
    %3 = memref.load %arg1[%c3] : memref<96xf32, #tpu.memory_space<smem>>
    %c4 = arith.constant 4 : index
    %4 = memref.load %arg1[%c4] : memref<96xf32, #tpu.memory_space<smem>>
    %c5 = arith.constant 5 : index
    %5 = memref.load %arg1[%c5] : memref<96xf32, #tpu.memory_space<smem>>
    %c6 = arith.constant 6 : index
    %6 = memref.load %arg1[%c6] : memref<96xf32, #tpu.memory_space<smem>>
    %c7 = arith.constant 7 : index
    %7 = memref.load %arg1[%c7] : memref<96xf32, #tpu.memory_space<smem>>
    %c8 = arith.constant 8 : index
    %8 = memref.load %arg1[%c8] : memref<96xf32, #tpu.memory_space<smem>>
    %c9 = arith.constant 9 : index
    %9 = memref.load %arg1[%c9] : memref<96xf32, #tpu.memory_space<smem>>
    %c10 = arith.constant 10 : index
    %10 = memref.load %arg1[%c10] : memref<96xf32, #tpu.memory_space<smem>>
    %c11 = arith.constant 11 : index
    %11 = memref.load %arg1[%c11] : memref<96xf32, #tpu.memory_space<smem>>
    %c12 = arith.constant 12 : index
    %12 = memref.load %arg1[%c12] : memref<96xf32, #tpu.memory_space<smem>>
    %c13 = arith.constant 13 : index
    %13 = memref.load %arg1[%c13] : memref<96xf32, #tpu.memory_space<smem>>
    %c14 = arith.constant 14 : index
    %14 = memref.load %arg1[%c14] : memref<96xf32, #tpu.memory_space<smem>>
    %c15 = arith.constant 15 : index
    %15 = memref.load %arg1[%c15] : memref<96xf32, #tpu.memory_space<smem>>
    %c16 = arith.constant 16 : index
    %16 = memref.load %arg1[%c16] : memref<96xf32, #tpu.memory_space<smem>>
    %c17 = arith.constant 17 : index
    %17 = memref.load %arg1[%c17] : memref<96xf32, #tpu.memory_space<smem>>
    %c18 = arith.constant 18 : index
    %18 = memref.load %arg1[%c18] : memref<96xf32, #tpu.memory_space<smem>>
    %c19 = arith.constant 19 : index
    %19 = memref.load %arg1[%c19] : memref<96xf32, #tpu.memory_space<smem>>
    %c20 = arith.constant 20 : index
    %20 = memref.load %arg1[%c20] : memref<96xf32, #tpu.memory_space<smem>>
    %c21 = arith.constant 21 : index
    %21 = memref.load %arg1[%c21] : memref<96xf32, #tpu.memory_space<smem>>
    %c22 = arith.constant 22 : index
    %22 = memref.load %arg1[%c22] : memref<96xf32, #tpu.memory_space<smem>>
    %c23 = arith.constant 23 : index
    %23 = memref.load %arg1[%c23] : memref<96xf32, #tpu.memory_space<smem>>
    %c24 = arith.constant 24 : index
    %24 = memref.load %arg1[%c24] : memref<96xf32, #tpu.memory_space<smem>>
    %c25 = arith.constant 25 : index
    %25 = memref.load %arg1[%c25] : memref<96xf32, #tpu.memory_space<smem>>
    %c26 = arith.constant 26 : index
    %26 = memref.load %arg1[%c26] : memref<96xf32, #tpu.memory_space<smem>>
    %c27 = arith.constant 27 : index
    %27 = memref.load %arg1[%c27] : memref<96xf32, #tpu.memory_space<smem>>
    %c28 = arith.constant 28 : index
    %28 = memref.load %arg1[%c28] : memref<96xf32, #tpu.memory_space<smem>>
    %c29 = arith.constant 29 : index
    %29 = memref.load %arg1[%c29] : memref<96xf32, #tpu.memory_space<smem>>
    %c30 = arith.constant 30 : index
    %30 = memref.load %arg1[%c30] : memref<96xf32, #tpu.memory_space<smem>>
    %c31 = arith.constant 31 : index
    %31 = memref.load %arg1[%c31] : memref<96xf32, #tpu.memory_space<smem>>
    %c32 = arith.constant 32 : index
    %32 = memref.load %arg1[%c32] : memref<96xf32, #tpu.memory_space<smem>>
    %c33 = arith.constant 33 : index
    %33 = memref.load %arg1[%c33] : memref<96xf32, #tpu.memory_space<smem>>
    %c34 = arith.constant 34 : index
    %34 = memref.load %arg1[%c34] : memref<96xf32, #tpu.memory_space<smem>>
    %c35 = arith.constant 35 : index
    %35 = memref.load %arg1[%c35] : memref<96xf32, #tpu.memory_space<smem>>
    %c36 = arith.constant 36 : index
    %36 = memref.load %arg1[%c36] : memref<96xf32, #tpu.memory_space<smem>>
    %c37 = arith.constant 37 : index
    %37 = memref.load %arg1[%c37] : memref<96xf32, #tpu.memory_space<smem>>
    %c38 = arith.constant 38 : index
    %38 = memref.load %arg1[%c38] : memref<96xf32, #tpu.memory_space<smem>>
    %c39 = arith.constant 39 : index
    %39 = memref.load %arg1[%c39] : memref<96xf32, #tpu.memory_space<smem>>
    %c40 = arith.constant 40 : index
    %40 = memref.load %arg1[%c40] : memref<96xf32, #tpu.memory_space<smem>>
    %c41 = arith.constant 41 : index
    %41 = memref.load %arg1[%c41] : memref<96xf32, #tpu.memory_space<smem>>
    %c42 = arith.constant 42 : index
    %42 = memref.load %arg1[%c42] : memref<96xf32, #tpu.memory_space<smem>>
    %c43 = arith.constant 43 : index
    %43 = memref.load %arg1[%c43] : memref<96xf32, #tpu.memory_space<smem>>
    %c44 = arith.constant 44 : index
    %44 = memref.load %arg1[%c44] : memref<96xf32, #tpu.memory_space<smem>>
    %c45 = arith.constant 45 : index
    %45 = memref.load %arg1[%c45] : memref<96xf32, #tpu.memory_space<smem>>
    %c46 = arith.constant 46 : index
    %46 = memref.load %arg1[%c46] : memref<96xf32, #tpu.memory_space<smem>>
    %c47 = arith.constant 47 : index
    %47 = memref.load %arg1[%c47] : memref<96xf32, #tpu.memory_space<smem>>
    %c48 = arith.constant 48 : index
    %48 = memref.load %arg1[%c48] : memref<96xf32, #tpu.memory_space<smem>>
    %c49 = arith.constant 49 : index
    %49 = memref.load %arg1[%c49] : memref<96xf32, #tpu.memory_space<smem>>
    %c50 = arith.constant 50 : index
    %50 = memref.load %arg1[%c50] : memref<96xf32, #tpu.memory_space<smem>>
    %c51 = arith.constant 51 : index
    %51 = memref.load %arg1[%c51] : memref<96xf32, #tpu.memory_space<smem>>
    %c52 = arith.constant 52 : index
    %52 = memref.load %arg1[%c52] : memref<96xf32, #tpu.memory_space<smem>>
    %c53 = arith.constant 53 : index
    %53 = memref.load %arg1[%c53] : memref<96xf32, #tpu.memory_space<smem>>
    %c54 = arith.constant 54 : index
    %54 = memref.load %arg1[%c54] : memref<96xf32, #tpu.memory_space<smem>>
    %c55 = arith.constant 55 : index
    %55 = memref.load %arg1[%c55] : memref<96xf32, #tpu.memory_space<smem>>
    %c56 = arith.constant 56 : index
    %56 = memref.load %arg1[%c56] : memref<96xf32, #tpu.memory_space<smem>>
    %c57 = arith.constant 57 : index
    %57 = memref.load %arg1[%c57] : memref<96xf32, #tpu.memory_space<smem>>
    %c58 = arith.constant 58 : index
    %58 = memref.load %arg1[%c58] : memref<96xf32, #tpu.memory_space<smem>>
    %c59 = arith.constant 59 : index
    %59 = memref.load %arg1[%c59] : memref<96xf32, #tpu.memory_space<smem>>
    %c60 = arith.constant 60 : index
    %60 = memref.load %arg1[%c60] : memref<96xf32, #tpu.memory_space<smem>>
    %c61 = arith.constant 61 : index
    %61 = memref.load %arg1[%c61] : memref<96xf32, #tpu.memory_space<smem>>
    %c62 = arith.constant 62 : index
    %62 = memref.load %arg1[%c62] : memref<96xf32, #tpu.memory_space<smem>>
    %c63 = arith.constant 63 : index
    %63 = memref.load %arg1[%c63] : memref<96xf32, #tpu.memory_space<smem>>
    %c64 = arith.constant 64 : index
    %64 = memref.load %arg1[%c64] : memref<96xf32, #tpu.memory_space<smem>>
    %c65 = arith.constant 65 : index
    %65 = memref.load %arg1[%c65] : memref<96xf32, #tpu.memory_space<smem>>
    %c66 = arith.constant 66 : index
    %66 = memref.load %arg1[%c66] : memref<96xf32, #tpu.memory_space<smem>>
    %c67 = arith.constant 67 : index
    %67 = memref.load %arg1[%c67] : memref<96xf32, #tpu.memory_space<smem>>
    %c68 = arith.constant 68 : index
    %68 = memref.load %arg1[%c68] : memref<96xf32, #tpu.memory_space<smem>>
    %c69 = arith.constant 69 : index
    %69 = memref.load %arg1[%c69] : memref<96xf32, #tpu.memory_space<smem>>
    %c70 = arith.constant 70 : index
    %70 = memref.load %arg1[%c70] : memref<96xf32, #tpu.memory_space<smem>>
    %c71 = arith.constant 71 : index
    %71 = memref.load %arg1[%c71] : memref<96xf32, #tpu.memory_space<smem>>
    %c72 = arith.constant 72 : index
    %72 = memref.load %arg1[%c72] : memref<96xf32, #tpu.memory_space<smem>>
    %c73 = arith.constant 73 : index
    %73 = memref.load %arg1[%c73] : memref<96xf32, #tpu.memory_space<smem>>
    %c74 = arith.constant 74 : index
    %74 = memref.load %arg1[%c74] : memref<96xf32, #tpu.memory_space<smem>>
    %c75 = arith.constant 75 : index
    %75 = memref.load %arg1[%c75] : memref<96xf32, #tpu.memory_space<smem>>
    %c76 = arith.constant 76 : index
    %76 = memref.load %arg1[%c76] : memref<96xf32, #tpu.memory_space<smem>>
    %c77 = arith.constant 77 : index
    %77 = memref.load %arg1[%c77] : memref<96xf32, #tpu.memory_space<smem>>
    %c78 = arith.constant 78 : index
    %78 = memref.load %arg1[%c78] : memref<96xf32, #tpu.memory_space<smem>>
    %c79 = arith.constant 79 : index
    %79 = memref.load %arg1[%c79] : memref<96xf32, #tpu.memory_space<smem>>
    %c80 = arith.constant 80 : index
    %80 = memref.load %arg1[%c80] : memref<96xf32, #tpu.memory_space<smem>>
    %c81 = arith.constant 81 : index
    %81 = memref.load %arg1[%c81] : memref<96xf32, #tpu.memory_space<smem>>
    %c82 = arith.constant 82 : index
    %82 = memref.load %arg1[%c82] : memref<96xf32, #tpu.memory_space<smem>>
    %c83 = arith.constant 83 : index
    %83 = memref.load %arg1[%c83] : memref<96xf32, #tpu.memory_space<smem>>
    %c84 = arith.constant 84 : index
    %84 = memref.load %arg1[%c84] : memref<96xf32, #tpu.memory_space<smem>>
    %c85 = arith.constant 85 : index
    %85 = memref.load %arg1[%c85] : memref<96xf32, #tpu.memory_space<smem>>
    %c86 = arith.constant 86 : index
    %86 = memref.load %arg1[%c86] : memref<96xf32, #tpu.memory_space<smem>>
    %c87 = arith.constant 87 : index
    %87 = memref.load %arg1[%c87] : memref<96xf32, #tpu.memory_space<smem>>
    %c88 = arith.constant 88 : index
    %88 = memref.load %arg1[%c88] : memref<96xf32, #tpu.memory_space<smem>>
    %c89 = arith.constant 89 : index
    %89 = memref.load %arg1[%c89] : memref<96xf32, #tpu.memory_space<smem>>
    %c90 = arith.constant 90 : index
    %90 = memref.load %arg1[%c90] : memref<96xf32, #tpu.memory_space<smem>>
    %c91 = arith.constant 91 : index
    %91 = memref.load %arg1[%c91] : memref<96xf32, #tpu.memory_space<smem>>
    %c92 = arith.constant 92 : index
    %92 = memref.load %arg1[%c92] : memref<96xf32, #tpu.memory_space<smem>>
    %c93 = arith.constant 93 : index
    %93 = memref.load %arg1[%c93] : memref<96xf32, #tpu.memory_space<smem>>
    %c94 = arith.constant 94 : index
    %94 = memref.load %arg1[%c94] : memref<96xf32, #tpu.memory_space<smem>>
    %c95 = arith.constant 95 : index
    %95 = memref.load %arg1[%c95] : memref<96xf32, #tpu.memory_space<smem>>
    %96 = tpu.iota {dimensions = array<i32: 0>} : vector<8x256xi32>
    %c0_i32 = arith.constant 0 : i32
    %97 = vector.broadcast %c0_i32 : i32 to vector<8x256xi32>
    %98 = arith.cmpi eq, %96, %97 : vector<8x256xi32>
    %99 = arith.extui %98 : vector<8x256xi1> to vector<8x256xi32>
    %100 = arith.sitofp %99 : vector<8x256xi32> to vector<8x256xf32>
    %c0_i32_0 = arith.constant 0 : i32
    %c1_i32 = arith.constant 1 : i32
    %101 = arith.muli %c0_i32_0, %c1_i32 : i32
    %c0_i32_1 = arith.constant 0 : i32
    %102 = arith.addi %c0_i32_1, %101 : i32
    %103 = arith.index_cast %102 : i32 to index
    %c0_2 = arith.constant 0 : index
    %c0_3 = arith.constant 0 : index
    %c0_4 = arith.constant 0 : index
    %104 = vector.load %arg2[%103, %c0_2, %c0_3, %c0_4] : memref<1x7x8x256xf32, #tpu.memory_space<vmem>>, vector<1x7x8x256xf32>
    %105 = vector.shape_cast %104 : vector<1x7x8x256xf32> to vector<7x8x256xf32>
    %106 = vector.extract_strided_slice %105 {offsets = [0, 0, 0], sizes = [1, 8, 256], strides = [1, 1, 1]} : vector<7x8x256xf32> to vector<1x8x256xf32>
    %107 = vector.shape_cast %106 : vector<1x8x256xf32> to vector<8x256xf32>
    %108 = vector.broadcast %0 : f32 to vector<8x256xf32>
    %109 = arith.mulf %108, %107 : vector<8x256xf32>
    %110 = vector.broadcast %8 : f32 to vector<8x256xf32>
    %111 = arith.mulf %110, %107 : vector<8x256xf32>
    %112 = vector.broadcast %16 : f32 to vector<8x256xf32>
    %113 = arith.mulf %112, %107 : vector<8x256xf32>
    %114 = vector.broadcast %24 : f32 to vector<8x256xf32>
    %115 = arith.mulf %114, %107 : vector<8x256xf32>
    %116 = vector.broadcast %32 : f32 to vector<8x256xf32>
    %117 = arith.mulf %116, %107 : vector<8x256xf32>
    %118 = vector.broadcast %40 : f32 to vector<8x256xf32>
    %119 = arith.mulf %118, %107 : vector<8x256xf32>
    %120 = vector.broadcast %48 : f32 to vector<8x256xf32>
    %121 = arith.mulf %120, %107 : vector<8x256xf32>
    %122 = vector.broadcast %56 : f32 to vector<8x256xf32>
    %123 = arith.mulf %122, %107 : vector<8x256xf32>
    %124 = vector.broadcast %64 : f32 to vector<8x256xf32>
    %125 = arith.mulf %124, %107 : vector<8x256xf32>
    %126 = vector.broadcast %72 : f32 to vector<8x256xf32>
    %127 = arith.mulf %126, %107 : vector<8x256xf32>
    %128 = vector.broadcast %80 : f32 to vector<8x256xf32>
    %129 = arith.mulf %128, %107 : vector<8x256xf32>
    %130 = vector.broadcast %88 : f32 to vector<8x256xf32>
    %131 = arith.mulf %130, %107 : vector<8x256xf32>
    %132 = vector.extract_strided_slice %105 {offsets = [1, 0, 0], sizes = [1, 8, 256], strides = [1, 1, 1]} : vector<7x8x256xf32> to vector<1x8x256xf32>
    %133 = vector.shape_cast %132 : vector<1x8x256xf32> to vector<8x256xf32>
    %134 = vector.broadcast %1 : f32 to vector<8x256xf32>
    %135 = arith.mulf %134, %133 : vector<8x256xf32>
    %136 = arith.addf %109, %135 : vector<8x256xf32>
    %137 = vector.broadcast %9 : f32 to vector<8x256xf32>
    %138 = arith.mulf %137, %133 : vector<8x256xf32>
    %139 = arith.addf %111, %138 : vector<8x256xf32>
    %140 = vector.broadcast %17 : f32 to vector<8x256xf32>
    %141 = arith.mulf %140, %133 : vector<8x256xf32>
    %142 = arith.addf %113, %141 : vector<8x256xf32>
    %143 = vector.broadcast %25 : f32 to vector<8x256xf32>
    %144 = arith.mulf %143, %133 : vector<8x256xf32>
    %145 = arith.addf %115, %144 : vector<8x256xf32>
    %146 = vector.broadcast %33 : f32 to vector<8x256xf32>
    %147 = arith.mulf %146, %133 : vector<8x256xf32>
    %148 = arith.addf %117, %147 : vector<8x256xf32>
    %149 = vector.broadcast %41 : f32 to vector<8x256xf32>
    %150 = arith.mulf %149, %133 : vector<8x256xf32>
    %151 = arith.addf %119, %150 : vector<8x256xf32>
    %152 = vector.broadcast %49 : f32 to vector<8x256xf32>
    %153 = arith.mulf %152, %133 : vector<8x256xf32>
    %154 = arith.addf %121, %153 : vector<8x256xf32>
    %155 = vector.broadcast %57 : f32 to vector<8x256xf32>
    %156 = arith.mulf %155, %133 : vector<8x256xf32>
    %157 = arith.addf %123, %156 : vector<8x256xf32>
    %158 = vector.broadcast %65 : f32 to vector<8x256xf32>
    %159 = arith.mulf %158, %133 : vector<8x256xf32>
    %160 = arith.addf %125, %159 : vector<8x256xf32>
    %161 = vector.broadcast %73 : f32 to vector<8x256xf32>
    %162 = arith.mulf %161, %133 : vector<8x256xf32>
    %163 = arith.addf %127, %162 : vector<8x256xf32>
    %164 = vector.broadcast %81 : f32 to vector<8x256xf32>
    %165 = arith.mulf %164, %133 : vector<8x256xf32>
    %166 = arith.addf %129, %165 : vector<8x256xf32>
    %167 = vector.broadcast %89 : f32 to vector<8x256xf32>
    %168 = arith.mulf %167, %133 : vector<8x256xf32>
    %169 = arith.addf %131, %168 : vector<8x256xf32>
    %170 = vector.extract_strided_slice %105 {offsets = [2, 0, 0], sizes = [1, 8, 256], strides = [1, 1, 1]} : vector<7x8x256xf32> to vector<1x8x256xf32>
    %171 = vector.shape_cast %170 : vector<1x8x256xf32> to vector<8x256xf32>
    %172 = vector.broadcast %2 : f32 to vector<8x256xf32>
    %173 = arith.mulf %172, %171 : vector<8x256xf32>
    %174 = arith.addf %136, %173 : vector<8x256xf32>
    %175 = vector.broadcast %10 : f32 to vector<8x256xf32>
    %176 = arith.mulf %175, %171 : vector<8x256xf32>
    %177 = arith.addf %139, %176 : vector<8x256xf32>
    %178 = vector.broadcast %18 : f32 to vector<8x256xf32>
    %179 = arith.mulf %178, %171 : vector<8x256xf32>
    %180 = arith.addf %142, %179 : vector<8x256xf32>
    %181 = vector.broadcast %26 : f32 to vector<8x256xf32>
    %182 = arith.mulf %181, %171 : vector<8x256xf32>
    %183 = arith.addf %145, %182 : vector<8x256xf32>
    %184 = vector.broadcast %34 : f32 to vector<8x256xf32>
    %185 = arith.mulf %184, %171 : vector<8x256xf32>
    %186 = arith.addf %148, %185 : vector<8x256xf32>
    %187 = vector.broadcast %42 : f32 to vector<8x256xf32>
    %188 = arith.mulf %187, %171 : vector<8x256xf32>
    %189 = arith.addf %151, %188 : vector<8x256xf32>
    %190 = vector.broadcast %50 : f32 to vector<8x256xf32>
    %191 = arith.mulf %190, %171 : vector<8x256xf32>
    %192 = arith.addf %154, %191 : vector<8x256xf32>
    %193 = vector.broadcast %58 : f32 to vector<8x256xf32>
    %194 = arith.mulf %193, %171 : vector<8x256xf32>
    %195 = arith.addf %157, %194 : vector<8x256xf32>
    %196 = vector.broadcast %66 : f32 to vector<8x256xf32>
    %197 = arith.mulf %196, %171 : vector<8x256xf32>
    %198 = arith.addf %160, %197 : vector<8x256xf32>
    %199 = vector.broadcast %74 : f32 to vector<8x256xf32>
    %200 = arith.mulf %199, %171 : vector<8x256xf32>
    %201 = arith.addf %163, %200 : vector<8x256xf32>
    %202 = vector.broadcast %82 : f32 to vector<8x256xf32>
    %203 = arith.mulf %202, %171 : vector<8x256xf32>
    %204 = arith.addf %166, %203 : vector<8x256xf32>
    %205 = vector.broadcast %90 : f32 to vector<8x256xf32>
    %206 = arith.mulf %205, %171 : vector<8x256xf32>
    %207 = arith.addf %169, %206 : vector<8x256xf32>
    %208 = vector.extract_strided_slice %105 {offsets = [3, 0, 0], sizes = [1, 8, 256], strides = [1, 1, 1]} : vector<7x8x256xf32> to vector<1x8x256xf32>
    %209 = vector.shape_cast %208 : vector<1x8x256xf32> to vector<8x256xf32>
    %210 = vector.broadcast %3 : f32 to vector<8x256xf32>
    %211 = arith.mulf %210, %209 : vector<8x256xf32>
    %212 = arith.addf %174, %211 : vector<8x256xf32>
    %213 = vector.broadcast %11 : f32 to vector<8x256xf32>
    %214 = arith.mulf %213, %209 : vector<8x256xf32>
    %215 = arith.addf %177, %214 : vector<8x256xf32>
    %216 = vector.broadcast %19 : f32 to vector<8x256xf32>
    %217 = arith.mulf %216, %209 : vector<8x256xf32>
    %218 = arith.addf %180, %217 : vector<8x256xf32>
    %219 = vector.broadcast %27 : f32 to vector<8x256xf32>
    %220 = arith.mulf %219, %209 : vector<8x256xf32>
    %221 = arith.addf %183, %220 : vector<8x256xf32>
    %222 = vector.broadcast %35 : f32 to vector<8x256xf32>
    %223 = arith.mulf %222, %209 : vector<8x256xf32>
    %224 = arith.addf %186, %223 : vector<8x256xf32>
    %225 = vector.broadcast %43 : f32 to vector<8x256xf32>
    %226 = arith.mulf %225, %209 : vector<8x256xf32>
    %227 = arith.addf %189, %226 : vector<8x256xf32>
    %228 = vector.broadcast %51 : f32 to vector<8x256xf32>
    %229 = arith.mulf %228, %209 : vector<8x256xf32>
    %230 = arith.addf %192, %229 : vector<8x256xf32>
    %231 = vector.broadcast %59 : f32 to vector<8x256xf32>
    %232 = arith.mulf %231, %209 : vector<8x256xf32>
    %233 = arith.addf %195, %232 : vector<8x256xf32>
    %234 = vector.broadcast %67 : f32 to vector<8x256xf32>
    %235 = arith.mulf %234, %209 : vector<8x256xf32>
    %236 = arith.addf %198, %235 : vector<8x256xf32>
    %237 = vector.broadcast %75 : f32 to vector<8x256xf32>
    %238 = arith.mulf %237, %209 : vector<8x256xf32>
    %239 = arith.addf %201, %238 : vector<8x256xf32>
    %240 = vector.broadcast %83 : f32 to vector<8x256xf32>
    %241 = arith.mulf %240, %209 : vector<8x256xf32>
    %242 = arith.addf %204, %241 : vector<8x256xf32>
    %243 = vector.broadcast %91 : f32 to vector<8x256xf32>
    %244 = arith.mulf %243, %209 : vector<8x256xf32>
    %245 = arith.addf %207, %244 : vector<8x256xf32>
    %246 = vector.extract_strided_slice %105 {offsets = [4, 0, 0], sizes = [1, 8, 256], strides = [1, 1, 1]} : vector<7x8x256xf32> to vector<1x8x256xf32>
    %247 = vector.shape_cast %246 : vector<1x8x256xf32> to vector<8x256xf32>
    %248 = vector.broadcast %4 : f32 to vector<8x256xf32>
    %249 = arith.mulf %248, %247 : vector<8x256xf32>
    %250 = arith.addf %212, %249 : vector<8x256xf32>
    %251 = vector.broadcast %12 : f32 to vector<8x256xf32>
    %252 = arith.mulf %251, %247 : vector<8x256xf32>
    %253 = arith.addf %215, %252 : vector<8x256xf32>
    %254 = vector.broadcast %20 : f32 to vector<8x256xf32>
    %255 = arith.mulf %254, %247 : vector<8x256xf32>
    %256 = arith.addf %218, %255 : vector<8x256xf32>
    %257 = vector.broadcast %28 : f32 to vector<8x256xf32>
    %258 = arith.mulf %257, %247 : vector<8x256xf32>
    %259 = arith.addf %221, %258 : vector<8x256xf32>
    %260 = vector.broadcast %36 : f32 to vector<8x256xf32>
    %261 = arith.mulf %260, %247 : vector<8x256xf32>
    %262 = arith.addf %224, %261 : vector<8x256xf32>
    %263 = vector.broadcast %44 : f32 to vector<8x256xf32>
    %264 = arith.mulf %263, %247 : vector<8x256xf32>
    %265 = arith.addf %227, %264 : vector<8x256xf32>
    %266 = vector.broadcast %52 : f32 to vector<8x256xf32>
    %267 = arith.mulf %266, %247 : vector<8x256xf32>
    %268 = arith.addf %230, %267 : vector<8x256xf32>
    %269 = vector.broadcast %60 : f32 to vector<8x256xf32>
    %270 = arith.mulf %269, %247 : vector<8x256xf32>
    %271 = arith.addf %233, %270 : vector<8x256xf32>
    %272 = vector.broadcast %68 : f32 to vector<8x256xf32>
    %273 = arith.mulf %272, %247 : vector<8x256xf32>
    %274 = arith.addf %236, %273 : vector<8x256xf32>
    %275 = vector.broadcast %76 : f32 to vector<8x256xf32>
    %276 = arith.mulf %275, %247 : vector<8x256xf32>
    %277 = arith.addf %239, %276 : vector<8x256xf32>
    %278 = vector.broadcast %84 : f32 to vector<8x256xf32>
    %279 = arith.mulf %278, %247 : vector<8x256xf32>
    %280 = arith.addf %242, %279 : vector<8x256xf32>
    %281 = vector.broadcast %92 : f32 to vector<8x256xf32>
    %282 = arith.mulf %281, %247 : vector<8x256xf32>
    %283 = arith.addf %245, %282 : vector<8x256xf32>
    %284 = vector.extract_strided_slice %105 {offsets = [5, 0, 0], sizes = [1, 8, 256], strides = [1, 1, 1]} : vector<7x8x256xf32> to vector<1x8x256xf32>
    %285 = vector.shape_cast %284 : vector<1x8x256xf32> to vector<8x256xf32>
    %286 = vector.broadcast %5 : f32 to vector<8x256xf32>
    %287 = arith.mulf %286, %285 : vector<8x256xf32>
    %288 = arith.addf %250, %287 : vector<8x256xf32>
    %289 = vector.broadcast %13 : f32 to vector<8x256xf32>
    %290 = arith.mulf %289, %285 : vector<8x256xf32>
    %291 = arith.addf %253, %290 : vector<8x256xf32>
    %292 = vector.broadcast %21 : f32 to vector<8x256xf32>
    %293 = arith.mulf %292, %285 : vector<8x256xf32>
    %294 = arith.addf %256, %293 : vector<8x256xf32>
    %295 = vector.broadcast %29 : f32 to vector<8x256xf32>
    %296 = arith.mulf %295, %285 : vector<8x256xf32>
    %297 = arith.addf %259, %296 : vector<8x256xf32>
    %298 = vector.broadcast %37 : f32 to vector<8x256xf32>
    %299 = arith.mulf %298, %285 : vector<8x256xf32>
    %300 = arith.addf %262, %299 : vector<8x256xf32>
    %301 = vector.broadcast %45 : f32 to vector<8x256xf32>
    %302 = arith.mulf %301, %285 : vector<8x256xf32>
    %303 = arith.addf %265, %302 : vector<8x256xf32>
    %304 = vector.broadcast %53 : f32 to vector<8x256xf32>
    %305 = arith.mulf %304, %285 : vector<8x256xf32>
    %306 = arith.addf %268, %305 : vector<8x256xf32>
    %307 = vector.broadcast %61 : f32 to vector<8x256xf32>
    %308 = arith.mulf %307, %285 : vector<8x256xf32>
    %309 = arith.addf %271, %308 : vector<8x256xf32>
    %310 = vector.broadcast %69 : f32 to vector<8x256xf32>
    %311 = arith.mulf %310, %285 : vector<8x256xf32>
    %312 = arith.addf %274, %311 : vector<8x256xf32>
    %313 = vector.broadcast %77 : f32 to vector<8x256xf32>
    %314 = arith.mulf %313, %285 : vector<8x256xf32>
    %315 = arith.addf %277, %314 : vector<8x256xf32>
    %316 = vector.broadcast %85 : f32 to vector<8x256xf32>
    %317 = arith.mulf %316, %285 : vector<8x256xf32>
    %318 = arith.addf %280, %317 : vector<8x256xf32>
    %319 = vector.broadcast %93 : f32 to vector<8x256xf32>
    %320 = arith.mulf %319, %285 : vector<8x256xf32>
    %321 = arith.addf %283, %320 : vector<8x256xf32>
    %322 = vector.extract_strided_slice %105 {offsets = [6, 0, 0], sizes = [1, 8, 256], strides = [1, 1, 1]} : vector<7x8x256xf32> to vector<1x8x256xf32>
    %323 = vector.shape_cast %322 : vector<1x8x256xf32> to vector<8x256xf32>
    %324 = vector.broadcast %6 : f32 to vector<8x256xf32>
    %325 = arith.mulf %324, %323 : vector<8x256xf32>
    %326 = arith.addf %288, %325 : vector<8x256xf32>
    %327 = vector.broadcast %14 : f32 to vector<8x256xf32>
    %328 = arith.mulf %327, %323 : vector<8x256xf32>
    %329 = arith.addf %291, %328 : vector<8x256xf32>
    %330 = vector.broadcast %22 : f32 to vector<8x256xf32>
    %331 = arith.mulf %330, %323 : vector<8x256xf32>
    %332 = arith.addf %294, %331 : vector<8x256xf32>
    %333 = vector.broadcast %30 : f32 to vector<8x256xf32>
    %334 = arith.mulf %333, %323 : vector<8x256xf32>
    %335 = arith.addf %297, %334 : vector<8x256xf32>
    %336 = vector.broadcast %38 : f32 to vector<8x256xf32>
    %337 = arith.mulf %336, %323 : vector<8x256xf32>
    %338 = arith.addf %300, %337 : vector<8x256xf32>
    %339 = vector.broadcast %46 : f32 to vector<8x256xf32>
    %340 = arith.mulf %339, %323 : vector<8x256xf32>
    %341 = arith.addf %303, %340 : vector<8x256xf32>
    %342 = vector.broadcast %54 : f32 to vector<8x256xf32>
    %343 = arith.mulf %342, %323 : vector<8x256xf32>
    %344 = arith.addf %306, %343 : vector<8x256xf32>
    %345 = vector.broadcast %62 : f32 to vector<8x256xf32>
    %346 = arith.mulf %345, %323 : vector<8x256xf32>
    %347 = arith.addf %309, %346 : vector<8x256xf32>
    %348 = vector.broadcast %70 : f32 to vector<8x256xf32>
    %349 = arith.mulf %348, %323 : vector<8x256xf32>
    %350 = arith.addf %312, %349 : vector<8x256xf32>
    %351 = vector.broadcast %78 : f32 to vector<8x256xf32>
    %352 = arith.mulf %351, %323 : vector<8x256xf32>
    %353 = arith.addf %315, %352 : vector<8x256xf32>
    %354 = vector.broadcast %86 : f32 to vector<8x256xf32>
    %355 = arith.mulf %354, %323 : vector<8x256xf32>
    %356 = arith.addf %318, %355 : vector<8x256xf32>
    %357 = vector.broadcast %94 : f32 to vector<8x256xf32>
    %358 = arith.mulf %357, %323 : vector<8x256xf32>
    %359 = arith.addf %321, %358 : vector<8x256xf32>
    %360 = vector.broadcast %7 : f32 to vector<8x256xf32>
    %361 = arith.mulf %360, %100 : vector<8x256xf32>
    %362 = arith.addf %326, %361 : vector<8x256xf32>
    %363 = vector.broadcast %15 : f32 to vector<8x256xf32>
    %364 = arith.mulf %363, %100 : vector<8x256xf32>
    %365 = arith.addf %329, %364 : vector<8x256xf32>
    %366 = vector.broadcast %23 : f32 to vector<8x256xf32>
    %367 = arith.mulf %366, %100 : vector<8x256xf32>
    %368 = arith.addf %332, %367 : vector<8x256xf32>
    %369 = vector.broadcast %31 : f32 to vector<8x256xf32>
    %370 = arith.mulf %369, %100 : vector<8x256xf32>
    %371 = arith.addf %335, %370 : vector<8x256xf32>
    %372 = vector.broadcast %39 : f32 to vector<8x256xf32>
    %373 = arith.mulf %372, %100 : vector<8x256xf32>
    %374 = arith.addf %338, %373 : vector<8x256xf32>
    %375 = vector.broadcast %47 : f32 to vector<8x256xf32>
    %376 = arith.mulf %375, %100 : vector<8x256xf32>
    %377 = arith.addf %341, %376 : vector<8x256xf32>
    %378 = vector.broadcast %55 : f32 to vector<8x256xf32>
    %379 = arith.mulf %378, %100 : vector<8x256xf32>
    %380 = arith.addf %344, %379 : vector<8x256xf32>
    %381 = vector.broadcast %63 : f32 to vector<8x256xf32>
    %382 = arith.mulf %381, %100 : vector<8x256xf32>
    %383 = arith.addf %347, %382 : vector<8x256xf32>
    %384 = vector.broadcast %71 : f32 to vector<8x256xf32>
    %385 = arith.mulf %384, %100 : vector<8x256xf32>
    %386 = arith.addf %350, %385 : vector<8x256xf32>
    %387 = vector.broadcast %79 : f32 to vector<8x256xf32>
    %388 = arith.mulf %387, %100 : vector<8x256xf32>
    %389 = arith.addf %353, %388 : vector<8x256xf32>
    %390 = vector.broadcast %87 : f32 to vector<8x256xf32>
    %391 = arith.mulf %390, %100 : vector<8x256xf32>
    %392 = arith.addf %356, %391 : vector<8x256xf32>
    %393 = vector.broadcast %95 : f32 to vector<8x256xf32>
    %394 = arith.mulf %393, %100 : vector<8x256xf32>
    %395 = arith.addf %359, %394 : vector<8x256xf32>
    %396 = vector.extract_strided_slice %362 {offsets = [0, 0], sizes = [1, 256], strides = [1, 1]} : vector<8x256xf32> to vector<1x256xf32>
    %397 = vector.broadcast %396 : vector<1x256xf32> to vector<8x256xf32>
    %398 = arith.mulf %397, %365 : vector<8x256xf32>
    %399 = vector.extract_strided_slice %362 {offsets = [1, 0], sizes = [1, 256], strides = [1, 1]} : vector<8x256xf32> to vector<1x256xf32>
    %c1_i32_5 = arith.constant 1 : i32
    %400 = tpu.dynamic_rotate %365 by %c1_i32_5 dim 0 : vector<8x256xf32>, i32 -> vector<8x256xf32>
    %401 = vector.broadcast %399 : vector<1x256xf32> to vector<8x256xf32>
    %402 = arith.mulf %401, %400 : vector<8x256xf32>
    %403 = arith.addf %398, %402 : vector<8x256xf32>
    %404 = vector.extract_strided_slice %362 {offsets = [2, 0], sizes = [1, 256], strides = [1, 1]} : vector<8x256xf32> to vector<1x256xf32>
    %c2_i32 = arith.constant 2 : i32
    %405 = tpu.dynamic_rotate %365 by %c2_i32 dim 0 : vector<8x256xf32>, i32 -> vector<8x256xf32>
    %406 = vector.broadcast %404 : vector<1x256xf32> to vector<8x256xf32>
    %407 = arith.mulf %406, %405 : vector<8x256xf32>
    %408 = arith.addf %403, %407 : vector<8x256xf32>
    %409 = vector.extract_strided_slice %362 {offsets = [3, 0], sizes = [1, 256], strides = [1, 1]} : vector<8x256xf32> to vector<1x256xf32>
    %c3_i32 = arith.constant 3 : i32
    %410 = tpu.dynamic_rotate %365 by %c3_i32 dim 0 : vector<8x256xf32>, i32 -> vector<8x256xf32>
    %411 = vector.broadcast %409 : vector<1x256xf32> to vector<8x256xf32>
    %412 = arith.mulf %411, %410 : vector<8x256xf32>
    %413 = arith.addf %408, %412 : vector<8x256xf32>
    %414 = vector.extract_strided_slice %362 {offsets = [4, 0], sizes = [1, 256], strides = [1, 1]} : vector<8x256xf32> to vector<1x256xf32>
    %c4_i32 = arith.constant 4 : i32
    %415 = tpu.dynamic_rotate %365 by %c4_i32 dim 0 : vector<8x256xf32>, i32 -> vector<8x256xf32>
    %416 = vector.broadcast %414 : vector<1x256xf32> to vector<8x256xf32>
    %417 = arith.mulf %416, %415 : vector<8x256xf32>
    %418 = arith.addf %413, %417 : vector<8x256xf32>
    %419 = vector.extract_strided_slice %362 {offsets = [5, 0], sizes = [1, 256], strides = [1, 1]} : vector<8x256xf32> to vector<1x256xf32>
    %c5_i32 = arith.constant 5 : i32
    %420 = tpu.dynamic_rotate %365 by %c5_i32 dim 0 : vector<8x256xf32>, i32 -> vector<8x256xf32>
    %421 = vector.broadcast %419 : vector<1x256xf32> to vector<8x256xf32>
    %422 = arith.mulf %421, %420 : vector<8x256xf32>
    %423 = arith.addf %418, %422 : vector<8x256xf32>
    %424 = vector.extract_strided_slice %362 {offsets = [6, 0], sizes = [1, 256], strides = [1, 1]} : vector<8x256xf32> to vector<1x256xf32>
    %c6_i32 = arith.constant 6 : i32
    %425 = tpu.dynamic_rotate %365 by %c6_i32 dim 0 : vector<8x256xf32>, i32 -> vector<8x256xf32>
    %426 = vector.broadcast %424 : vector<1x256xf32> to vector<8x256xf32>
    %427 = arith.mulf %426, %425 : vector<8x256xf32>
    %428 = arith.addf %423, %427 : vector<8x256xf32>
    %429 = vector.extract_strided_slice %362 {offsets = [7, 0], sizes = [1, 256], strides = [1, 1]} : vector<8x256xf32> to vector<1x256xf32>
    %c7_i32 = arith.constant 7 : i32
    %430 = tpu.dynamic_rotate %365 by %c7_i32 dim 0 : vector<8x256xf32>, i32 -> vector<8x256xf32>
    %431 = vector.broadcast %429 : vector<1x256xf32> to vector<8x256xf32>
    %432 = arith.mulf %431, %430 : vector<8x256xf32>
    %433 = arith.addf %428, %432 : vector<8x256xf32>
    %434 = vector.extract_strided_slice %368 {offsets = [0, 0], sizes = [1, 256], strides = [1, 1]} : vector<8x256xf32> to vector<1x256xf32>
    %435 = vector.broadcast %434 : vector<1x256xf32> to vector<8x256xf32>
    %436 = arith.mulf %435, %371 : vector<8x256xf32>
    %437 = vector.extract_strided_slice %368 {offsets = [1, 0], sizes = [1, 256], strides = [1, 1]} : vector<8x256xf32> to vector<1x256xf32>
    %c1_i32_6 = arith.constant 1 : i32
    %438 = tpu.dynamic_rotate %371 by %c1_i32_6 dim 0 : vector<8x256xf32>, i32 -> vector<8x256xf32>
    %439 = vector.broadcast %437 : vector<1x256xf32> to vector<8x256xf32>
    %440 = arith.mulf %439, %438 : vector<8x256xf32>
    %441 = arith.addf %436, %440 : vector<8x256xf32>
    %442 = vector.extract_strided_slice %368 {offsets = [2, 0], sizes = [1, 256], strides = [1, 1]} : vector<8x256xf32> to vector<1x256xf32>
    %c2_i32_7 = arith.constant 2 : i32
    %443 = tpu.dynamic_rotate %371 by %c2_i32_7 dim 0 : vector<8x256xf32>, i32 -> vector<8x256xf32>
    %444 = vector.broadcast %442 : vector<1x256xf32> to vector<8x256xf32>
    %445 = arith.mulf %444, %443 : vector<8x256xf32>
    %446 = arith.addf %441, %445 : vector<8x256xf32>
    %447 = vector.extract_strided_slice %368 {offsets = [3, 0], sizes = [1, 256], strides = [1, 1]} : vector<8x256xf32> to vector<1x256xf32>
    %c3_i32_8 = arith.constant 3 : i32
    %448 = tpu.dynamic_rotate %371 by %c3_i32_8 dim 0 : vector<8x256xf32>, i32 -> vector<8x256xf32>
    %449 = vector.broadcast %447 : vector<1x256xf32> to vector<8x256xf32>
    %450 = arith.mulf %449, %448 : vector<8x256xf32>
    %451 = arith.addf %446, %450 : vector<8x256xf32>
    %452 = vector.extract_strided_slice %368 {offsets = [4, 0], sizes = [1, 256], strides = [1, 1]} : vector<8x256xf32> to vector<1x256xf32>
    %c4_i32_9 = arith.constant 4 : i32
    %453 = tpu.dynamic_rotate %371 by %c4_i32_9 dim 0 : vector<8x256xf32>, i32 -> vector<8x256xf32>
    %454 = vector.broadcast %452 : vector<1x256xf32> to vector<8x256xf32>
    %455 = arith.mulf %454, %453 : vector<8x256xf32>
    %456 = arith.addf %451, %455 : vector<8x256xf32>
    %457 = vector.extract_strided_slice %368 {offsets = [5, 0], sizes = [1, 256], strides = [1, 1]} : vector<8x256xf32> to vector<1x256xf32>
    %c5_i32_10 = arith.constant 5 : i32
    %458 = tpu.dynamic_rotate %371 by %c5_i32_10 dim 0 : vector<8x256xf32>, i32 -> vector<8x256xf32>
    %459 = vector.broadcast %457 : vector<1x256xf32> to vector<8x256xf32>
    %460 = arith.mulf %459, %458 : vector<8x256xf32>
    %461 = arith.addf %456, %460 : vector<8x256xf32>
    %462 = vector.extract_strided_slice %368 {offsets = [6, 0], sizes = [1, 256], strides = [1, 1]} : vector<8x256xf32> to vector<1x256xf32>
    %c6_i32_11 = arith.constant 6 : i32
    %463 = tpu.dynamic_rotate %371 by %c6_i32_11 dim 0 : vector<8x256xf32>, i32 -> vector<8x256xf32>
    %464 = vector.broadcast %462 : vector<1x256xf32> to vector<8x256xf32>
    %465 = arith.mulf %464, %463 : vector<8x256xf32>
    %466 = arith.addf %461, %465 : vector<8x256xf32>
    %467 = vector.extract_strided_slice %368 {offsets = [7, 0], sizes = [1, 256], strides = [1, 1]} : vector<8x256xf32> to vector<1x256xf32>
    %c7_i32_12 = arith.constant 7 : i32
    %468 = tpu.dynamic_rotate %371 by %c7_i32_12 dim 0 : vector<8x256xf32>, i32 -> vector<8x256xf32>
    %469 = vector.broadcast %467 : vector<1x256xf32> to vector<8x256xf32>
    %470 = arith.mulf %469, %468 : vector<8x256xf32>
    %471 = arith.addf %466, %470 : vector<8x256xf32>
    %472 = vector.extract_strided_slice %433 {offsets = [0, 0], sizes = [1, 256], strides = [1, 1]} : vector<8x256xf32> to vector<1x256xf32>
    %473 = vector.broadcast %472 : vector<1x256xf32> to vector<8x256xf32>
    %474 = arith.mulf %473, %471 : vector<8x256xf32>
    %475 = vector.extract_strided_slice %433 {offsets = [1, 0], sizes = [1, 256], strides = [1, 1]} : vector<8x256xf32> to vector<1x256xf32>
    %c1_i32_13 = arith.constant 1 : i32
    %476 = tpu.dynamic_rotate %471 by %c1_i32_13 dim 0 : vector<8x256xf32>, i32 -> vector<8x256xf32>
    %477 = vector.broadcast %475 : vector<1x256xf32> to vector<8x256xf32>
    %478 = arith.mulf %477, %476 : vector<8x256xf32>
    %479 = arith.addf %474, %478 : vector<8x256xf32>
    %480 = vector.extract_strided_slice %433 {offsets = [2, 0], sizes = [1, 256], strides = [1, 1]} : vector<8x256xf32> to vector<1x256xf32>
    %c2_i32_14 = arith.constant 2 : i32
    %481 = tpu.dynamic_rotate %471 by %c2_i32_14 dim 0 : vector<8x256xf32>, i32 -> vector<8x256xf32>
    %482 = vector.broadcast %480 : vector<1x256xf32> to vector<8x256xf32>
    %483 = arith.mulf %482, %481 : vector<8x256xf32>
    %484 = arith.addf %479, %483 : vector<8x256xf32>
    %485 = vector.extract_strided_slice %433 {offsets = [3, 0], sizes = [1, 256], strides = [1, 1]} : vector<8x256xf32> to vector<1x256xf32>
    %c3_i32_15 = arith.constant 3 : i32
    %486 = tpu.dynamic_rotate %471 by %c3_i32_15 dim 0 : vector<8x256xf32>, i32 -> vector<8x256xf32>
    %487 = vector.broadcast %485 : vector<1x256xf32> to vector<8x256xf32>
    %488 = arith.mulf %487, %486 : vector<8x256xf32>
    %489 = arith.addf %484, %488 : vector<8x256xf32>
    %490 = vector.extract_strided_slice %433 {offsets = [4, 0], sizes = [1, 256], strides = [1, 1]} : vector<8x256xf32> to vector<1x256xf32>
    %c4_i32_16 = arith.constant 4 : i32
    %491 = tpu.dynamic_rotate %471 by %c4_i32_16 dim 0 : vector<8x256xf32>, i32 -> vector<8x256xf32>
    %492 = vector.broadcast %490 : vector<1x256xf32> to vector<8x256xf32>
    %493 = arith.mulf %492, %491 : vector<8x256xf32>
    %494 = arith.addf %489, %493 : vector<8x256xf32>
    %495 = vector.extract_strided_slice %433 {offsets = [5, 0], sizes = [1, 256], strides = [1, 1]} : vector<8x256xf32> to vector<1x256xf32>
    %c5_i32_17 = arith.constant 5 : i32
    %496 = tpu.dynamic_rotate %471 by %c5_i32_17 dim 0 : vector<8x256xf32>, i32 -> vector<8x256xf32>
    %497 = vector.broadcast %495 : vector<1x256xf32> to vector<8x256xf32>
    %498 = arith.mulf %497, %496 : vector<8x256xf32>
    %499 = arith.addf %494, %498 : vector<8x256xf32>
    %500 = vector.extract_strided_slice %433 {offsets = [6, 0], sizes = [1, 256], strides = [1, 1]} : vector<8x256xf32> to vector<1x256xf32>
    %c6_i32_18 = arith.constant 6 : i32
    %501 = tpu.dynamic_rotate %471 by %c6_i32_18 dim 0 : vector<8x256xf32>, i32 -> vector<8x256xf32>
    %502 = vector.broadcast %500 : vector<1x256xf32> to vector<8x256xf32>
    %503 = arith.mulf %502, %501 : vector<8x256xf32>
    %504 = arith.addf %499, %503 : vector<8x256xf32>
    %505 = vector.extract_strided_slice %433 {offsets = [7, 0], sizes = [1, 256], strides = [1, 1]} : vector<8x256xf32> to vector<1x256xf32>
    %c7_i32_19 = arith.constant 7 : i32
    %506 = tpu.dynamic_rotate %471 by %c7_i32_19 dim 0 : vector<8x256xf32>, i32 -> vector<8x256xf32>
    %507 = vector.broadcast %505 : vector<1x256xf32> to vector<8x256xf32>
    %508 = arith.mulf %507, %506 : vector<8x256xf32>
    %509 = arith.addf %504, %508 : vector<8x256xf32>
    %510 = vector.extract_strided_slice %374 {offsets = [0, 0], sizes = [1, 256], strides = [1, 1]} : vector<8x256xf32> to vector<1x256xf32>
    %511 = vector.broadcast %510 : vector<1x256xf32> to vector<8x256xf32>
    %512 = arith.mulf %511, %377 : vector<8x256xf32>
    %513 = vector.extract_strided_slice %374 {offsets = [1, 0], sizes = [1, 256], strides = [1, 1]} : vector<8x256xf32> to vector<1x256xf32>
    %c1_i32_20 = arith.constant 1 : i32
    %514 = tpu.dynamic_rotate %377 by %c1_i32_20 dim 0 : vector<8x256xf32>, i32 -> vector<8x256xf32>
    %515 = vector.broadcast %513 : vector<1x256xf32> to vector<8x256xf32>
    %516 = arith.mulf %515, %514 : vector<8x256xf32>
    %517 = arith.addf %512, %516 : vector<8x256xf32>
    %518 = vector.extract_strided_slice %374 {offsets = [2, 0], sizes = [1, 256], strides = [1, 1]} : vector<8x256xf32> to vector<1x256xf32>
    %c2_i32_21 = arith.constant 2 : i32
    %519 = tpu.dynamic_rotate %377 by %c2_i32_21 dim 0 : vector<8x256xf32>, i32 -> vector<8x256xf32>
    %520 = vector.broadcast %518 : vector<1x256xf32> to vector<8x256xf32>
    %521 = arith.mulf %520, %519 : vector<8x256xf32>
    %522 = arith.addf %517, %521 : vector<8x256xf32>
    %523 = vector.extract_strided_slice %374 {offsets = [3, 0], sizes = [1, 256], strides = [1, 1]} : vector<8x256xf32> to vector<1x256xf32>
    %c3_i32_22 = arith.constant 3 : i32
    %524 = tpu.dynamic_rotate %377 by %c3_i32_22 dim 0 : vector<8x256xf32>, i32 -> vector<8x256xf32>
    %525 = vector.broadcast %523 : vector<1x256xf32> to vector<8x256xf32>
    %526 = arith.mulf %525, %524 : vector<8x256xf32>
    %527 = arith.addf %522, %526 : vector<8x256xf32>
    %528 = vector.extract_strided_slice %374 {offsets = [4, 0], sizes = [1, 256], strides = [1, 1]} : vector<8x256xf32> to vector<1x256xf32>
    %c4_i32_23 = arith.constant 4 : i32
    %529 = tpu.dynamic_rotate %377 by %c4_i32_23 dim 0 : vector<8x256xf32>, i32 -> vector<8x256xf32>
    %530 = vector.broadcast %528 : vector<1x256xf32> to vector<8x256xf32>
    %531 = arith.mulf %530, %529 : vector<8x256xf32>
    %532 = arith.addf %527, %531 : vector<8x256xf32>
    %533 = vector.extract_strided_slice %374 {offsets = [5, 0], sizes = [1, 256], strides = [1, 1]} : vector<8x256xf32> to vector<1x256xf32>
    %c5_i32_24 = arith.constant 5 : i32
    %534 = tpu.dynamic_rotate %377 by %c5_i32_24 dim 0 : vector<8x256xf32>, i32 -> vector<8x256xf32>
    %535 = vector.broadcast %533 : vector<1x256xf32> to vector<8x256xf32>
    %536 = arith.mulf %535, %534 : vector<8x256xf32>
    %537 = arith.addf %532, %536 : vector<8x256xf32>
    %538 = vector.extract_strided_slice %374 {offsets = [6, 0], sizes = [1, 256], strides = [1, 1]} : vector<8x256xf32> to vector<1x256xf32>
    %c6_i32_25 = arith.constant 6 : i32
    %539 = tpu.dynamic_rotate %377 by %c6_i32_25 dim 0 : vector<8x256xf32>, i32 -> vector<8x256xf32>
    %540 = vector.broadcast %538 : vector<1x256xf32> to vector<8x256xf32>
    %541 = arith.mulf %540, %539 : vector<8x256xf32>
    %542 = arith.addf %537, %541 : vector<8x256xf32>
    %543 = vector.extract_strided_slice %374 {offsets = [7, 0], sizes = [1, 256], strides = [1, 1]} : vector<8x256xf32> to vector<1x256xf32>
    %c7_i32_26 = arith.constant 7 : i32
    %544 = tpu.dynamic_rotate %377 by %c7_i32_26 dim 0 : vector<8x256xf32>, i32 -> vector<8x256xf32>
    %545 = vector.broadcast %543 : vector<1x256xf32> to vector<8x256xf32>
    %546 = arith.mulf %545, %544 : vector<8x256xf32>
    %547 = arith.addf %542, %546 : vector<8x256xf32>
    %548 = vector.extract_strided_slice %509 {offsets = [0, 0], sizes = [1, 256], strides = [1, 1]} : vector<8x256xf32> to vector<1x256xf32>
    %549 = vector.broadcast %548 : vector<1x256xf32> to vector<8x256xf32>
    %550 = arith.mulf %549, %547 : vector<8x256xf32>
    %551 = vector.extract_strided_slice %509 {offsets = [1, 0], sizes = [1, 256], strides = [1, 1]} : vector<8x256xf32> to vector<1x256xf32>
    %c1_i32_27 = arith.constant 1 : i32
    %552 = tpu.dynamic_rotate %547 by %c1_i32_27 dim 0 : vector<8x256xf32>, i32 -> vector<8x256xf32>
    %553 = vector.broadcast %551 : vector<1x256xf32> to vector<8x256xf32>
    %554 = arith.mulf %553, %552 : vector<8x256xf32>
    %555 = arith.addf %550, %554 : vector<8x256xf32>
    %556 = vector.extract_strided_slice %509 {offsets = [2, 0], sizes = [1, 256], strides = [1, 1]} : vector<8x256xf32> to vector<1x256xf32>
    %c2_i32_28 = arith.constant 2 : i32
    %557 = tpu.dynamic_rotate %547 by %c2_i32_28 dim 0 : vector<8x256xf32>, i32 -> vector<8x256xf32>
    %558 = vector.broadcast %556 : vector<1x256xf32> to vector<8x256xf32>
    %559 = arith.mulf %558, %557 : vector<8x256xf32>
    %560 = arith.addf %555, %559 : vector<8x256xf32>
    %561 = vector.extract_strided_slice %509 {offsets = [3, 0], sizes = [1, 256], strides = [1, 1]} : vector<8x256xf32> to vector<1x256xf32>
    %c3_i32_29 = arith.constant 3 : i32
    %562 = tpu.dynamic_rotate %547 by %c3_i32_29 dim 0 : vector<8x256xf32>, i32 -> vector<8x256xf32>
    %563 = vector.broadcast %561 : vector<1x256xf32> to vector<8x256xf32>
    %564 = arith.mulf %563, %562 : vector<8x256xf32>
    %565 = arith.addf %560, %564 : vector<8x256xf32>
    %566 = vector.extract_strided_slice %509 {offsets = [4, 0], sizes = [1, 256], strides = [1, 1]} : vector<8x256xf32> to vector<1x256xf32>
    %c4_i32_30 = arith.constant 4 : i32
    %567 = tpu.dynamic_rotate %547 by %c4_i32_30 dim 0 : vector<8x256xf32>, i32 -> vector<8x256xf32>
    %568 = vector.broadcast %566 : vector<1x256xf32> to vector<8x256xf32>
    %569 = arith.mulf %568, %567 : vector<8x256xf32>
    %570 = arith.addf %565, %569 : vector<8x256xf32>
    %571 = vector.extract_strided_slice %509 {offsets = [5, 0], sizes = [1, 256], strides = [1, 1]} : vector<8x256xf32> to vector<1x256xf32>
    %c5_i32_31 = arith.constant 5 : i32
    %572 = tpu.dynamic_rotate %547 by %c5_i32_31 dim 0 : vector<8x256xf32>, i32 -> vector<8x256xf32>
    %573 = vector.broadcast %571 : vector<1x256xf32> to vector<8x256xf32>
    %574 = arith.mulf %573, %572 : vector<8x256xf32>
    %575 = arith.addf %570, %574 : vector<8x256xf32>
    %576 = vector.extract_strided_slice %509 {offsets = [6, 0], sizes = [1, 256], strides = [1, 1]} : vector<8x256xf32> to vector<1x256xf32>
    %c6_i32_32 = arith.constant 6 : i32
    %577 = tpu.dynamic_rotate %547 by %c6_i32_32 dim 0 : vector<8x256xf32>, i32 -> vector<8x256xf32>
    %578 = vector.broadcast %576 : vector<1x256xf32> to vector<8x256xf32>
    %579 = arith.mulf %578, %577 : vector<8x256xf32>
    %580 = arith.addf %575, %579 : vector<8x256xf32>
    %581 = vector.extract_strided_slice %509 {offsets = [7, 0], sizes = [1, 256], strides = [1, 1]} : vector<8x256xf32> to vector<1x256xf32>
    %c7_i32_33 = arith.constant 7 : i32
    %582 = tpu.dynamic_rotate %547 by %c7_i32_33 dim 0 : vector<8x256xf32>, i32 -> vector<8x256xf32>
    %583 = vector.broadcast %581 : vector<1x256xf32> to vector<8x256xf32>
    %584 = arith.mulf %583, %582 : vector<8x256xf32>
    %585 = arith.addf %580, %584 : vector<8x256xf32>
    %586 = vector.extract_strided_slice %380 {offsets = [0, 0], sizes = [1, 256], strides = [1, 1]} : vector<8x256xf32> to vector<1x256xf32>
    %587 = vector.broadcast %586 : vector<1x256xf32> to vector<8x256xf32>
    %588 = arith.mulf %587, %383 : vector<8x256xf32>
    %589 = vector.extract_strided_slice %380 {offsets = [1, 0], sizes = [1, 256], strides = [1, 1]} : vector<8x256xf32> to vector<1x256xf32>
    %c1_i32_34 = arith.constant 1 : i32
    %590 = tpu.dynamic_rotate %383 by %c1_i32_34 dim 0 : vector<8x256xf32>, i32 -> vector<8x256xf32>
    %591 = vector.broadcast %589 : vector<1x256xf32> to vector<8x256xf32>
    %592 = arith.mulf %591, %590 : vector<8x256xf32>
    %593 = arith.addf %588, %592 : vector<8x256xf32>
    %594 = vector.extract_strided_slice %380 {offsets = [2, 0], sizes = [1, 256], strides = [1, 1]} : vector<8x256xf32> to vector<1x256xf32>
    %c2_i32_35 = arith.constant 2 : i32
    %595 = tpu.dynamic_rotate %383 by %c2_i32_35 dim 0 : vector<8x256xf32>, i32 -> vector<8x256xf32>
    %596 = vector.broadcast %594 : vector<1x256xf32> to vector<8x256xf32>
    %597 = arith.mulf %596, %595 : vector<8x256xf32>
    %598 = arith.addf %593, %597 : vector<8x256xf32>
    %599 = vector.extract_strided_slice %380 {offsets = [3, 0], sizes = [1, 256], strides = [1, 1]} : vector<8x256xf32> to vector<1x256xf32>
    %c3_i32_36 = arith.constant 3 : i32
    %600 = tpu.dynamic_rotate %383 by %c3_i32_36 dim 0 : vector<8x256xf32>, i32 -> vector<8x256xf32>
    %601 = vector.broadcast %599 : vector<1x256xf32> to vector<8x256xf32>
    %602 = arith.mulf %601, %600 : vector<8x256xf32>
    %603 = arith.addf %598, %602 : vector<8x256xf32>
    %604 = vector.extract_strided_slice %380 {offsets = [4, 0], sizes = [1, 256], strides = [1, 1]} : vector<8x256xf32> to vector<1x256xf32>
    %c4_i32_37 = arith.constant 4 : i32
    %605 = tpu.dynamic_rotate %383 by %c4_i32_37 dim 0 : vector<8x256xf32>, i32 -> vector<8x256xf32>
    %606 = vector.broadcast %604 : vector<1x256xf32> to vector<8x256xf32>
    %607 = arith.mulf %606, %605 : vector<8x256xf32>
    %608 = arith.addf %603, %607 : vector<8x256xf32>
    %609 = vector.extract_strided_slice %380 {offsets = [5, 0], sizes = [1, 256], strides = [1, 1]} : vector<8x256xf32> to vector<1x256xf32>
    %c5_i32_38 = arith.constant 5 : i32
    %610 = tpu.dynamic_rotate %383 by %c5_i32_38 dim 0 : vector<8x256xf32>, i32 -> vector<8x256xf32>
    %611 = vector.broadcast %609 : vector<1x256xf32> to vector<8x256xf32>
    %612 = arith.mulf %611, %610 : vector<8x256xf32>
    %613 = arith.addf %608, %612 : vector<8x256xf32>
    %614 = vector.extract_strided_slice %380 {offsets = [6, 0], sizes = [1, 256], strides = [1, 1]} : vector<8x256xf32> to vector<1x256xf32>
    %c6_i32_39 = arith.constant 6 : i32
    %615 = tpu.dynamic_rotate %383 by %c6_i32_39 dim 0 : vector<8x256xf32>, i32 -> vector<8x256xf32>
    %616 = vector.broadcast %614 : vector<1x256xf32> to vector<8x256xf32>
    %617 = arith.mulf %616, %615 : vector<8x256xf32>
    %618 = arith.addf %613, %617 : vector<8x256xf32>
    %619 = vector.extract_strided_slice %380 {offsets = [7, 0], sizes = [1, 256], strides = [1, 1]} : vector<8x256xf32> to vector<1x256xf32>
    %c7_i32_40 = arith.constant 7 : i32
    %620 = tpu.dynamic_rotate %383 by %c7_i32_40 dim 0 : vector<8x256xf32>, i32 -> vector<8x256xf32>
    %621 = vector.broadcast %619 : vector<1x256xf32> to vector<8x256xf32>
    %622 = arith.mulf %621, %620 : vector<8x256xf32>
    %623 = arith.addf %618, %622 : vector<8x256xf32>
    %624 = vector.extract_strided_slice %386 {offsets = [0, 0], sizes = [1, 256], strides = [1, 1]} : vector<8x256xf32> to vector<1x256xf32>
    %625 = vector.broadcast %624 : vector<1x256xf32> to vector<8x256xf32>
    %626 = arith.mulf %625, %389 : vector<8x256xf32>
    %627 = vector.extract_strided_slice %386 {offsets = [1, 0], sizes = [1, 256], strides = [1, 1]} : vector<8x256xf32> to vector<1x256xf32>
    %c1_i32_41 = arith.constant 1 : i32
    %628 = tpu.dynamic_rotate %389 by %c1_i32_41 dim 0 : vector<8x256xf32>, i32 -> vector<8x256xf32>
    %629 = vector.broadcast %627 : vector<1x256xf32> to vector<8x256xf32>
    %630 = arith.mulf %629, %628 : vector<8x256xf32>
    %631 = arith.addf %626, %630 : vector<8x256xf32>
    %632 = vector.extract_strided_slice %386 {offsets = [2, 0], sizes = [1, 256], strides = [1, 1]} : vector<8x256xf32> to vector<1x256xf32>
    %c2_i32_42 = arith.constant 2 : i32
    %633 = tpu.dynamic_rotate %389 by %c2_i32_42 dim 0 : vector<8x256xf32>, i32 -> vector<8x256xf32>
    %634 = vector.broadcast %632 : vector<1x256xf32> to vector<8x256xf32>
    %635 = arith.mulf %634, %633 : vector<8x256xf32>
    %636 = arith.addf %631, %635 : vector<8x256xf32>
    %637 = vector.extract_strided_slice %386 {offsets = [3, 0], sizes = [1, 256], strides = [1, 1]} : vector<8x256xf32> to vector<1x256xf32>
    %c3_i32_43 = arith.constant 3 : i32
    %638 = tpu.dynamic_rotate %389 by %c3_i32_43 dim 0 : vector<8x256xf32>, i32 -> vector<8x256xf32>
    %639 = vector.broadcast %637 : vector<1x256xf32> to vector<8x256xf32>
    %640 = arith.mulf %639, %638 : vector<8x256xf32>
    %641 = arith.addf %636, %640 : vector<8x256xf32>
    %642 = vector.extract_strided_slice %386 {offsets = [4, 0], sizes = [1, 256], strides = [1, 1]} : vector<8x256xf32> to vector<1x256xf32>
    %c4_i32_44 = arith.constant 4 : i32
    %643 = tpu.dynamic_rotate %389 by %c4_i32_44 dim 0 : vector<8x256xf32>, i32 -> vector<8x256xf32>
    %644 = vector.broadcast %642 : vector<1x256xf32> to vector<8x256xf32>
    %645 = arith.mulf %644, %643 : vector<8x256xf32>
    %646 = arith.addf %641, %645 : vector<8x256xf32>
    %647 = vector.extract_strided_slice %386 {offsets = [5, 0], sizes = [1, 256], strides = [1, 1]} : vector<8x256xf32> to vector<1x256xf32>
    %c5_i32_45 = arith.constant 5 : i32
    %648 = tpu.dynamic_rotate %389 by %c5_i32_45 dim 0 : vector<8x256xf32>, i32 -> vector<8x256xf32>
    %649 = vector.broadcast %647 : vector<1x256xf32> to vector<8x256xf32>
    %650 = arith.mulf %649, %648 : vector<8x256xf32>
    %651 = arith.addf %646, %650 : vector<8x256xf32>
    %652 = vector.extract_strided_slice %386 {offsets = [6, 0], sizes = [1, 256], strides = [1, 1]} : vector<8x256xf32> to vector<1x256xf32>
    %c6_i32_46 = arith.constant 6 : i32
    %653 = tpu.dynamic_rotate %389 by %c6_i32_46 dim 0 : vector<8x256xf32>, i32 -> vector<8x256xf32>
    %654 = vector.broadcast %652 : vector<1x256xf32> to vector<8x256xf32>
    %655 = arith.mulf %654, %653 : vector<8x256xf32>
    %656 = arith.addf %651, %655 : vector<8x256xf32>
    %657 = vector.extract_strided_slice %386 {offsets = [7, 0], sizes = [1, 256], strides = [1, 1]} : vector<8x256xf32> to vector<1x256xf32>
    %c7_i32_47 = arith.constant 7 : i32
    %658 = tpu.dynamic_rotate %389 by %c7_i32_47 dim 0 : vector<8x256xf32>, i32 -> vector<8x256xf32>
    %659 = vector.broadcast %657 : vector<1x256xf32> to vector<8x256xf32>
    %660 = arith.mulf %659, %658 : vector<8x256xf32>
    %661 = arith.addf %656, %660 : vector<8x256xf32>
    %662 = vector.extract_strided_slice %623 {offsets = [0, 0], sizes = [1, 256], strides = [1, 1]} : vector<8x256xf32> to vector<1x256xf32>
    %663 = vector.broadcast %662 : vector<1x256xf32> to vector<8x256xf32>
    %664 = arith.mulf %663, %661 : vector<8x256xf32>
    %665 = vector.extract_strided_slice %623 {offsets = [1, 0], sizes = [1, 256], strides = [1, 1]} : vector<8x256xf32> to vector<1x256xf32>
    %c1_i32_48 = arith.constant 1 : i32
    %666 = tpu.dynamic_rotate %661 by %c1_i32_48 dim 0 : vector<8x256xf32>, i32 -> vector<8x256xf32>
    %667 = vector.broadcast %665 : vector<1x256xf32> to vector<8x256xf32>
    %668 = arith.mulf %667, %666 : vector<8x256xf32>
    %669 = arith.addf %664, %668 : vector<8x256xf32>
    %670 = vector.extract_strided_slice %623 {offsets = [2, 0], sizes = [1, 256], strides = [1, 1]} : vector<8x256xf32> to vector<1x256xf32>
    %c2_i32_49 = arith.constant 2 : i32
    %671 = tpu.dynamic_rotate %661 by %c2_i32_49 dim 0 : vector<8x256xf32>, i32 -> vector<8x256xf32>
    %672 = vector.broadcast %670 : vector<1x256xf32> to vector<8x256xf32>
    %673 = arith.mulf %672, %671 : vector<8x256xf32>
    %674 = arith.addf %669, %673 : vector<8x256xf32>
    %675 = vector.extract_strided_slice %623 {offsets = [3, 0], sizes = [1, 256], strides = [1, 1]} : vector<8x256xf32> to vector<1x256xf32>
    %c3_i32_50 = arith.constant 3 : i32
    %676 = tpu.dynamic_rotate %661 by %c3_i32_50 dim 0 : vector<8x256xf32>, i32 -> vector<8x256xf32>
    %677 = vector.broadcast %675 : vector<1x256xf32> to vector<8x256xf32>
    %678 = arith.mulf %677, %676 : vector<8x256xf32>
    %679 = arith.addf %674, %678 : vector<8x256xf32>
    %680 = vector.extract_strided_slice %623 {offsets = [4, 0], sizes = [1, 256], strides = [1, 1]} : vector<8x256xf32> to vector<1x256xf32>
    %c4_i32_51 = arith.constant 4 : i32
    %681 = tpu.dynamic_rotate %661 by %c4_i32_51 dim 0 : vector<8x256xf32>, i32 -> vector<8x256xf32>
    %682 = vector.broadcast %680 : vector<1x256xf32> to vector<8x256xf32>
    %683 = arith.mulf %682, %681 : vector<8x256xf32>
    %684 = arith.addf %679, %683 : vector<8x256xf32>
    %685 = vector.extract_strided_slice %623 {offsets = [5, 0], sizes = [1, 256], strides = [1, 1]} : vector<8x256xf32> to vector<1x256xf32>
    %c5_i32_52 = arith.constant 5 : i32
    %686 = tpu.dynamic_rotate %661 by %c5_i32_52 dim 0 : vector<8x256xf32>, i32 -> vector<8x256xf32>
    %687 = vector.broadcast %685 : vector<1x256xf32> to vector<8x256xf32>
    %688 = arith.mulf %687, %686 : vector<8x256xf32>
    %689 = arith.addf %684, %688 : vector<8x256xf32>
    %690 = vector.extract_strided_slice %623 {offsets = [6, 0], sizes = [1, 256], strides = [1, 1]} : vector<8x256xf32> to vector<1x256xf32>
    %c6_i32_53 = arith.constant 6 : i32
    %691 = tpu.dynamic_rotate %661 by %c6_i32_53 dim 0 : vector<8x256xf32>, i32 -> vector<8x256xf32>
    %692 = vector.broadcast %690 : vector<1x256xf32> to vector<8x256xf32>
    %693 = arith.mulf %692, %691 : vector<8x256xf32>
    %694 = arith.addf %689, %693 : vector<8x256xf32>
    %695 = vector.extract_strided_slice %623 {offsets = [7, 0], sizes = [1, 256], strides = [1, 1]} : vector<8x256xf32> to vector<1x256xf32>
    %c7_i32_54 = arith.constant 7 : i32
    %696 = tpu.dynamic_rotate %661 by %c7_i32_54 dim 0 : vector<8x256xf32>, i32 -> vector<8x256xf32>
    %697 = vector.broadcast %695 : vector<1x256xf32> to vector<8x256xf32>
    %698 = arith.mulf %697, %696 : vector<8x256xf32>
    %699 = arith.addf %694, %698 : vector<8x256xf32>
    %700 = vector.extract_strided_slice %392 {offsets = [0, 0], sizes = [1, 256], strides = [1, 1]} : vector<8x256xf32> to vector<1x256xf32>
    %701 = vector.broadcast %700 : vector<1x256xf32> to vector<8x256xf32>
    %702 = arith.mulf %701, %395 : vector<8x256xf32>
    %703 = vector.extract_strided_slice %392 {offsets = [1, 0], sizes = [1, 256], strides = [1, 1]} : vector<8x256xf32> to vector<1x256xf32>
    %c1_i32_55 = arith.constant 1 : i32
    %704 = tpu.dynamic_rotate %395 by %c1_i32_55 dim 0 : vector<8x256xf32>, i32 -> vector<8x256xf32>
    %705 = vector.broadcast %703 : vector<1x256xf32> to vector<8x256xf32>
    %706 = arith.mulf %705, %704 : vector<8x256xf32>
    %707 = arith.addf %702, %706 : vector<8x256xf32>
    %708 = vector.extract_strided_slice %392 {offsets = [2, 0], sizes = [1, 256], strides = [1, 1]} : vector<8x256xf32> to vector<1x256xf32>
    %c2_i32_56 = arith.constant 2 : i32
    %709 = tpu.dynamic_rotate %395 by %c2_i32_56 dim 0 : vector<8x256xf32>, i32 -> vector<8x256xf32>
    %710 = vector.broadcast %708 : vector<1x256xf32> to vector<8x256xf32>
    %711 = arith.mulf %710, %709 : vector<8x256xf32>
    %712 = arith.addf %707, %711 : vector<8x256xf32>
    %713 = vector.extract_strided_slice %392 {offsets = [3, 0], sizes = [1, 256], strides = [1, 1]} : vector<8x256xf32> to vector<1x256xf32>
    %c3_i32_57 = arith.constant 3 : i32
    %714 = tpu.dynamic_rotate %395 by %c3_i32_57 dim 0 : vector<8x256xf32>, i32 -> vector<8x256xf32>
    %715 = vector.broadcast %713 : vector<1x256xf32> to vector<8x256xf32>
    %716 = arith.mulf %715, %714 : vector<8x256xf32>
    %717 = arith.addf %712, %716 : vector<8x256xf32>
    %718 = vector.extract_strided_slice %392 {offsets = [4, 0], sizes = [1, 256], strides = [1, 1]} : vector<8x256xf32> to vector<1x256xf32>
    %c4_i32_58 = arith.constant 4 : i32
    %719 = tpu.dynamic_rotate %395 by %c4_i32_58 dim 0 : vector<8x256xf32>, i32 -> vector<8x256xf32>
    %720 = vector.broadcast %718 : vector<1x256xf32> to vector<8x256xf32>
    %721 = arith.mulf %720, %719 : vector<8x256xf32>
    %722 = arith.addf %717, %721 : vector<8x256xf32>
    %723 = vector.extract_strided_slice %392 {offsets = [5, 0], sizes = [1, 256], strides = [1, 1]} : vector<8x256xf32> to vector<1x256xf32>
    %c5_i32_59 = arith.constant 5 : i32
    %724 = tpu.dynamic_rotate %395 by %c5_i32_59 dim 0 : vector<8x256xf32>, i32 -> vector<8x256xf32>
    %725 = vector.broadcast %723 : vector<1x256xf32> to vector<8x256xf32>
    %726 = arith.mulf %725, %724 : vector<8x256xf32>
    %727 = arith.addf %722, %726 : vector<8x256xf32>
    %728 = vector.extract_strided_slice %392 {offsets = [6, 0], sizes = [1, 256], strides = [1, 1]} : vector<8x256xf32> to vector<1x256xf32>
    %c6_i32_60 = arith.constant 6 : i32
    %729 = tpu.dynamic_rotate %395 by %c6_i32_60 dim 0 : vector<8x256xf32>, i32 -> vector<8x256xf32>
    %730 = vector.broadcast %728 : vector<1x256xf32> to vector<8x256xf32>
    %731 = arith.mulf %730, %729 : vector<8x256xf32>
    %732 = arith.addf %727, %731 : vector<8x256xf32>
    %733 = vector.extract_strided_slice %392 {offsets = [7, 0], sizes = [1, 256], strides = [1, 1]} : vector<8x256xf32> to vector<1x256xf32>
    %c7_i32_61 = arith.constant 7 : i32
    %734 = tpu.dynamic_rotate %395 by %c7_i32_61 dim 0 : vector<8x256xf32>, i32 -> vector<8x256xf32>
    %735 = vector.broadcast %733 : vector<1x256xf32> to vector<8x256xf32>
    %736 = arith.mulf %735, %734 : vector<8x256xf32>
    %737 = arith.addf %732, %736 : vector<8x256xf32>
    %738 = vector.extract_strided_slice %699 {offsets = [0, 0], sizes = [1, 256], strides = [1, 1]} : vector<8x256xf32> to vector<1x256xf32>
    %739 = vector.broadcast %738 : vector<1x256xf32> to vector<8x256xf32>
    %740 = arith.mulf %739, %737 : vector<8x256xf32>
    %741 = vector.extract_strided_slice %699 {offsets = [1, 0], sizes = [1, 256], strides = [1, 1]} : vector<8x256xf32> to vector<1x256xf32>
    %c1_i32_62 = arith.constant 1 : i32
    %742 = tpu.dynamic_rotate %737 by %c1_i32_62 dim 0 : vector<8x256xf32>, i32 -> vector<8x256xf32>
    %743 = vector.broadcast %741 : vector<1x256xf32> to vector<8x256xf32>
    %744 = arith.mulf %743, %742 : vector<8x256xf32>
    %745 = arith.addf %740, %744 : vector<8x256xf32>
    %746 = vector.extract_strided_slice %699 {offsets = [2, 0], sizes = [1, 256], strides = [1, 1]} : vector<8x256xf32> to vector<1x256xf32>
    %c2_i32_63 = arith.constant 2 : i32
    %747 = tpu.dynamic_rotate %737 by %c2_i32_63 dim 0 : vector<8x256xf32>, i32 -> vector<8x256xf32>
    %748 = vector.broadcast %746 : vector<1x256xf32> to vector<8x256xf32>
    %749 = arith.mulf %748, %747 : vector<8x256xf32>
    %750 = arith.addf %745, %749 : vector<8x256xf32>
    %751 = vector.extract_strided_slice %699 {offsets = [3, 0], sizes = [1, 256], strides = [1, 1]} : vector<8x256xf32> to vector<1x256xf32>
    %c3_i32_64 = arith.constant 3 : i32
    %752 = tpu.dynamic_rotate %737 by %c3_i32_64 dim 0 : vector<8x256xf32>, i32 -> vector<8x256xf32>
    %753 = vector.broadcast %751 : vector<1x256xf32> to vector<8x256xf32>
    %754 = arith.mulf %753, %752 : vector<8x256xf32>
    %755 = arith.addf %750, %754 : vector<8x256xf32>
    %756 = vector.extract_strided_slice %699 {offsets = [4, 0], sizes = [1, 256], strides = [1, 1]} : vector<8x256xf32> to vector<1x256xf32>
    %c4_i32_65 = arith.constant 4 : i32
    %757 = tpu.dynamic_rotate %737 by %c4_i32_65 dim 0 : vector<8x256xf32>, i32 -> vector<8x256xf32>
    %758 = vector.broadcast %756 : vector<1x256xf32> to vector<8x256xf32>
    %759 = arith.mulf %758, %757 : vector<8x256xf32>
    %760 = arith.addf %755, %759 : vector<8x256xf32>
    %761 = vector.extract_strided_slice %699 {offsets = [5, 0], sizes = [1, 256], strides = [1, 1]} : vector<8x256xf32> to vector<1x256xf32>
    %c5_i32_66 = arith.constant 5 : i32
    %762 = tpu.dynamic_rotate %737 by %c5_i32_66 dim 0 : vector<8x256xf32>, i32 -> vector<8x256xf32>
    %763 = vector.broadcast %761 : vector<1x256xf32> to vector<8x256xf32>
    %764 = arith.mulf %763, %762 : vector<8x256xf32>
    %765 = arith.addf %760, %764 : vector<8x256xf32>
    %766 = vector.extract_strided_slice %699 {offsets = [6, 0], sizes = [1, 256], strides = [1, 1]} : vector<8x256xf32> to vector<1x256xf32>
    %c6_i32_67 = arith.constant 6 : i32
    %767 = tpu.dynamic_rotate %737 by %c6_i32_67 dim 0 : vector<8x256xf32>, i32 -> vector<8x256xf32>
    %768 = vector.broadcast %766 : vector<1x256xf32> to vector<8x256xf32>
    %769 = arith.mulf %768, %767 : vector<8x256xf32>
    %770 = arith.addf %765, %769 : vector<8x256xf32>
    %771 = vector.extract_strided_slice %699 {offsets = [7, 0], sizes = [1, 256], strides = [1, 1]} : vector<8x256xf32> to vector<1x256xf32>
    %c7_i32_68 = arith.constant 7 : i32
    %772 = tpu.dynamic_rotate %737 by %c7_i32_68 dim 0 : vector<8x256xf32>, i32 -> vector<8x256xf32>
    %773 = vector.broadcast %771 : vector<1x256xf32> to vector<8x256xf32>
    %774 = arith.mulf %773, %772 : vector<8x256xf32>
    %775 = arith.addf %770, %774 : vector<8x256xf32>
    %776 = vector.extract_strided_slice %775 {offsets = [0, 0], sizes = [1, 256], strides = [1, 1]} : vector<8x256xf32> to vector<1x256xf32>
    %777 = vector.broadcast %776 : vector<1x256xf32> to vector<8x256xf32>
    %778 = arith.mulf %777, %585 : vector<8x256xf32>
    %779 = vector.extract_strided_slice %775 {offsets = [1, 0], sizes = [1, 256], strides = [1, 1]} : vector<8x256xf32> to vector<1x256xf32>
    %c7_i32_69 = arith.constant 7 : i32
    %780 = tpu.dynamic_rotate %585 by %c7_i32_69 dim 0 : vector<8x256xf32>, i32 -> vector<8x256xf32>
    %781 = vector.broadcast %779 : vector<1x256xf32> to vector<8x256xf32>
    %782 = arith.mulf %781, %780 : vector<8x256xf32>
    %783 = arith.addf %778, %782 : vector<8x256xf32>
    %784 = vector.extract_strided_slice %775 {offsets = [2, 0], sizes = [1, 256], strides = [1, 1]} : vector<8x256xf32> to vector<1x256xf32>
    %c6_i32_70 = arith.constant 6 : i32
    %785 = tpu.dynamic_rotate %585 by %c6_i32_70 dim 0 : vector<8x256xf32>, i32 -> vector<8x256xf32>
    %786 = vector.broadcast %784 : vector<1x256xf32> to vector<8x256xf32>
    %787 = arith.mulf %786, %785 : vector<8x256xf32>
    %788 = arith.addf %783, %787 : vector<8x256xf32>
    %789 = vector.extract_strided_slice %775 {offsets = [3, 0], sizes = [1, 256], strides = [1, 1]} : vector<8x256xf32> to vector<1x256xf32>
    %c5_i32_71 = arith.constant 5 : i32
    %790 = tpu.dynamic_rotate %585 by %c5_i32_71 dim 0 : vector<8x256xf32>, i32 -> vector<8x256xf32>
    %791 = vector.broadcast %789 : vector<1x256xf32> to vector<8x256xf32>
    %792 = arith.mulf %791, %790 : vector<8x256xf32>
    %793 = arith.addf %788, %792 : vector<8x256xf32>
    %794 = vector.extract_strided_slice %775 {offsets = [4, 0], sizes = [1, 256], strides = [1, 1]} : vector<8x256xf32> to vector<1x256xf32>
    %c4_i32_72 = arith.constant 4 : i32
    %795 = tpu.dynamic_rotate %585 by %c4_i32_72 dim 0 : vector<8x256xf32>, i32 -> vector<8x256xf32>
    %796 = vector.broadcast %794 : vector<1x256xf32> to vector<8x256xf32>
    %797 = arith.mulf %796, %795 : vector<8x256xf32>
    %798 = arith.addf %793, %797 : vector<8x256xf32>
    %799 = vector.extract_strided_slice %775 {offsets = [5, 0], sizes = [1, 256], strides = [1, 1]} : vector<8x256xf32> to vector<1x256xf32>
    %c3_i32_73 = arith.constant 3 : i32
    %800 = tpu.dynamic_rotate %585 by %c3_i32_73 dim 0 : vector<8x256xf32>, i32 -> vector<8x256xf32>
    %801 = vector.broadcast %799 : vector<1x256xf32> to vector<8x256xf32>
    %802 = arith.mulf %801, %800 : vector<8x256xf32>
    %803 = arith.addf %798, %802 : vector<8x256xf32>
    %804 = vector.extract_strided_slice %775 {offsets = [6, 0], sizes = [1, 256], strides = [1, 1]} : vector<8x256xf32> to vector<1x256xf32>
    %c2_i32_74 = arith.constant 2 : i32
    %805 = tpu.dynamic_rotate %585 by %c2_i32_74 dim 0 : vector<8x256xf32>, i32 -> vector<8x256xf32>
    %806 = vector.broadcast %804 : vector<1x256xf32> to vector<8x256xf32>
    %807 = arith.mulf %806, %805 : vector<8x256xf32>
    %808 = arith.addf %803, %807 : vector<8x256xf32>
    %809 = vector.extract_strided_slice %775 {offsets = [7, 0], sizes = [1, 256], strides = [1, 1]} : vector<8x256xf32> to vector<1x256xf32>
    %c1_i32_75 = arith.constant 1 : i32
    %810 = tpu.dynamic_rotate %585 by %c1_i32_75 dim 0 : vector<8x256xf32>, i32 -> vector<8x256xf32>
    %811 = vector.broadcast %809 : vector<1x256xf32> to vector<8x256xf32>
    %812 = arith.mulf %811, %810 : vector<8x256xf32>
    %813 = arith.addf %808, %812 : vector<8x256xf32>
    %814 = arith.index_cast %102 : i32 to index
    %c0_76 = arith.constant 0 : index
    %c0_77 = arith.constant 0 : index
    %815 = vector.load %arg3[%814, %c0_76, %c0_77] : memref<1x8x256xf32, #tpu.memory_space<vmem>>, vector<1x8x256xf32>
    %816 = vector.shape_cast %815 : vector<1x8x256xf32> to vector<8x256xf32>
    %817 = vector.shape_cast %813 : vector<8x256xf32> to vector<1x8x256xf32>
    tpu.vector_store %arg3[%814, %c0_76, %c0_77], %817 {strides = array<i32>} : memref<1x8x256xf32, #tpu.memory_space<vmem>>, vector<1x8x256xf32>,
    %c1_i32_78 = arith.constant 1 : i32
    return
  }
  func.func @transform_0(%arg0: i32) -> i32 {
    %c0_i32 = arith.constant 0 : i32
    %c0_i32_0 = arith.constant 0 : i32
    return %c0_i32 : i32
  }
  func.func @transform_1(%arg0: i32) -> (i32, i32, i32, i32) {
    %c0_i32 = arith.constant 0 : i32
    %c0_i32_0 = arith.constant 0 : i32
    %c0_i32_1 = arith.constant 0 : i32
    %c0_i32_2 = arith.constant 0 : i32
    return %arg0, %c0_i32, %c0_i32_0, %c0_i32_1 : i32, i32, i32, i32
  }
  func.func @transform_2(%arg0: i32) -> (i32, i32, i32) {
    %c0_i32 = arith.constant 0 : i32
    %c0_i32_0 = arith.constant 0 : i32
    %c0_i32_1 = arith.constant 0 : i32
    return %arg0, %c0_i32, %c0_i32_0 : i32, i32, i32
  }
}

</mosaic_0001>

<llo_original>
// kernel: tpu_custom_call.1
$region0: #{tpu_custom_call.1}
  #allocation0 [shape = 'u32[]', space=smem, size = 0x4, offset = 0x4, fixed_abs, tag = 'smem constant byte address 0x4 - core index']
  #allocation1 [shape = 'u32[72,128]{1,0:T(1,128)}', space=vmem, size = 0x9000, scoped, tag = 'internal scratch']
  %s0 = inlined_call_operand.hbm [shape: f32[96], index: 0, kind: input, shape index: {}]
  %s1 = inlined_call_operand.hbm [shape: f32[1,7,8,256], index: 1, kind: input, shape index: {}]
  %s2 = inlined_call_operand.hbm [shape: f32[1,8,256], index: 2, kind: output, shape index: {}]
  %s3 = sld [smem:[#allocation0]]
  $region26: #{tpu_custom_call.1} parent=0
    _
  %s5 = ssub.s32 1, %s3
  %s6 = scalar_select 0, %s5, %s3
  $region1: #{tpu_custom_call.1} parent=0
    #allocation2 [shape = 'u8[512]{0}', space=smem, size = 0x200, scoped, tag = 'input window, operand 0, single buffered']
    #allocation3 [shape = 's32[1]{0}', space=sflag, size = 0x4, scoped, tag = 'scoped memory for tpu_custom_call.1']
    #allocation4 [shape = 's32[1]{0}', space=sflag, size = 0x4, scoped, tag = 'scoped memory for tpu_custom_call.1']
    #allocation5 [shape = 's32[1]{0}', space=sflag, size = 0x4, scoped, tag = 'scoped memory for tpu_custom_call.1']
    #allocation6 [shape = 'u8[57344]{0}', space=vmem, size = 0xe000, scoped, tag = 'input window, operand 1, single buffered']
    #allocation7 [shape = 'u8[8192]{0}', space=vmem, size = 0x2000, scoped, tag = 'output window, operand 0, single buffered']
    %7 = vsyncpa [#allocation5], 0
    %8 = vsyncpa [#allocation3], 0
    %9 = vsyncpa [#allocation4], 0
    // Predicated region
    $region2: #{tpu_custom_call.1} parent=1 // pred_check
      _
    $region3: #{tpu_custom_call.1} parent=1 // pred_check_branch
      %11 = sbr.rel (0) target = $region5
    $region4: #{tpu_custom_call.1} parent=1 // pred_region
      %13 = vsyncadd [#allocation5], 0
      %s15 = sshll.u32 %s0, 4
      %s16 = int_to_ptr.hbm [resolvable:$true] %s15
      %18 = dma.hbm_to_smem %s16, 16, [#allocation2], [#allocation5]
    $region5: #{tpu_custom_call.1} parent=1 // pred_fallthru
      _
    // Predicated region
    $region6: #{tpu_custom_call.1} parent=1 // pred_check
      _
    $region7: #{tpu_custom_call.1} parent=1 // pred_check_branch
      %20 = sbr.rel (0) target = $region9
    $region8: #{tpu_custom_call.1} parent=1 // pred_region
      %22 = vsyncadd [#allocation3], 0
      %s23 = sshll.u32 %s1, 4
      %s24 = int_to_ptr.hbm [resolvable:$true] %s23
      %s25 = sshll.u32 [#allocation6], 4
      %s26 = int_to_ptr.vmem [resolvable:$true] %s25
      %31 = dma.hbm_to_vmem [thread:$0]  %s24, 1792, %s26, [#allocation3], 256, 256, 16
    $region9: #{tpu_custom_call.1} parent=1 // pred_fallthru
      _
    // Predicated region
    $region10: #{tpu_custom_call.1} parent=1 // pred_check
      _
    $region11: #{tpu_custom_call.1} parent=1 // pred_check_branch
      %33 = sbr.rel (0) target = $region13
    $region12: #{tpu_custom_call.1} parent=1 // pred_region
      %35 = dma.done [#allocation5], 16
    $region13: #{tpu_custom_call.1} parent=1 // pred_fallthru
      _
    // Predicated region
    $region14: #{tpu_custom_call.1} parent=1 // pred_check
      _
    $region15: #{tpu_custom_call.1} parent=1 // pred_check_branch
      %37 = sbr.rel (0) target = $region17
    $region16: #{tpu_custom_call.1} parent=1 // pred_region
      %39 = dma.done [#allocation3], 1792
    $region17: #{tpu_custom_call.1} parent=1 // pred_fallthru
      _
    %40 = sfence
    %s41 = sld [smem:[#allocation2]]
    %s42 = sld [smem:[#allocation2 + $0x1]]
    %s43 = sld [smem:[#allocation2 + $0x2]]
    %s44 = sld [smem:[#allocation2 + $0x3]]
    %s45 = sld [smem:[#allocation2 + $0x4]]
    %s46 = sld [smem:[#allocation2 + $0x5]]
    %s47 = sld [smem:[#allocation2 + $0x6]]
    %s48 = sld [smem:[#allocation2 + $0x7]]
    %s49 = sld [smem:[#allocation2 + $0x8]]
    %s50 = sld [smem:[#allocation2 + $0x9]]
    %s51 = sld [smem:[#allocation2 + $0xa]]
    %s52 = sld [smem:[#allocation2 + $0xb]]
    %s53 = sld [smem:[#allocation2 + $0xc]]
    %s54 = sld [smem:[#allocation2 + $0xd]]
    %s55 = sld [smem:[#allocation2 + $0xe]]
    %s56 = sld [smem:[#allocation2 + $0xf]]
    %s57 = sld [smem:[#allocation2 + $0x10]]
    %s58 = sld [smem:[#allocation2 + $0x11]]
    %s59 = sld [smem:[#allocation2 + $0x12]]
    %s60 = sld [smem:[#allocation2 + $0x13]]
    %s61 = sld [smem:[#allocation2 + $0x14]]
    %s62 = sld [smem:[#allocation2 + $0x15]]
    %s63 = sld [smem:[#allocation2 + $0x16]]
    %s64 = sld [smem:[#allocation2 + $0x17]]
    %s65 = sld [smem:[#allocation2 + $0x18]]
    %s66 = sld [smem:[#allocation2 + $0x19]]
    %s67 = sld [smem:[#allocation2 + $0x1a]]
    %s68 = sld [smem:[#allocation2 + $0x1b]]
    %s69 = sld [smem:[#allocation2 + $0x1c]]
    %s70 = sld [smem:[#allocation2 + $0x1d]]
    %s71 = sld [smem:[#allocation2 + $0x1e]]
    %s72 = sld [smem:[#allocation2 + $0x1f]]
    %s73 = sld [smem:[#allocation2 + $0x20]]
    %s74 = sld [smem:[#allocation2 + $0x21]]
    %s75 = sld [smem:[#allocation2 + $0x22]]
    %s76 = sld [smem:[#allocation2 + $0x23]]
    %s77 = sld [smem:[#allocation2 + $0x24]]
    %s78 = sld [smem:[#allocation2 + $0x25]]
    %s79 = sld [smem:[#allocation2 + $0x26]]
    %s80 = sld [smem:[#allocation2 + $0x27]]
    %s81 = sld [smem:[#allocation2 + $0x28]]
    %s82 = sld [smem:[#allocation2 + $0x29]]
    %s83 = sld [smem:[#allocation2 + $0x2a]]
    %s84 = sld [smem:[#allocation2 + $0x2b]]
    %s85 = sld [smem:[#allocation2 + $0x2c]]
    %s86 = sld [smem:[#allocation2 + $0x2d]]
    %s87 = sld [smem:[#allocation2 + $0x2e]]
    %s88 = sld [smem:[#allocation2 + $0x2f]]
    %s89 = sld [smem:[#allocation2 + $0x30]]
    %s90 = sld [smem:[#allocation2 + $0x31]]
    %s91 = sld [smem:[#allocation2 + $0x32]]
    %s92 = sld [smem:[#allocation2 + $0x33]]
    %s93 = sld [smem:[#allocation2 + $0x34]]
    %s94 = sld [smem:[#allocation2 + $0x35]]
    %s95 = sld [smem:[#allocation2 + $0x36]]
    %s96 = sld [smem:[#allocation2 + $0x37]]
    %s97 = sld [smem:[#allocation2 + $0x38]]
    %s98 = sld [smem:[#allocation2 + $0x39]]
    %s99 = sld [smem:[#allocation2 + $0x3a]]
    %s100 = sld [smem:[#allocation2 + $0x3b]]
    %s101 = sld [smem:[#allocation2 + $0x3c]]
    %s102 = sld [smem:[#allocation2 + $0x3d]]
    %s103 = sld [smem:[#allocation2 + $0x3e]]
    %s104 = sld [smem:[#allocation2 + $0x3f]]
    %s105 = sld [smem:[#allocation2 + $0x40]]
    %s106 = sld [smem:[#allocation2 + $0x41]]
    %s107 = sld [smem:[#allocation2 + $0x42]]
    %s108 = sld [smem:[#allocation2 + $0x43]]
    %s109 = sld [smem:[#allocation2 + $0x44]]
    %s110 = sld [smem:[#allocation2 + $0x45]]
    %s111 = sld [smem:[#allocation2 + $0x46]]
    %s112 = sld [smem:[#allocation2 + $0x47]]
    %s113 = sld [smem:[#allocation2 + $0x48]]
    %s114 = sld [smem:[#allocation2 + $0x49]]
    %s115 = sld [smem:[#allocation2 + $0x4a]]
    %s116 = sld [smem:[#allocation2 + $0x4b]]
    %s117 = sld [smem:[#allocation2 + $0x4c]]
    %s118 = sld [smem:[#allocation2 + $0x4d]]
    %s119 = sld [smem:[#allocation2 + $0x4e]]
    %s120 = sld [smem:[#allocation2 + $0x4f]]
    %s121 = sld [smem:[#allocation2 + $0x50]]
    %s122 = sld [smem:[#allocation2 + $0x51]]
    %s123 = sld [smem:[#allocation2 + $0x52]]
    %s124 = sld [smem:[#allocation2 + $0x53]]
    %s125 = sld [smem:[#allocation2 + $0x54]]
    %s126 = sld [smem:[#allocation2 + $0x55]]
    %s127 = sld [smem:[#allocation2 + $0x56]]
    %s128 = sld [smem:[#allocation2 + $0x57]]
    %s129 = sld [smem:[#allocation2 + $0x58]]
    %s130 = sld [smem:[#allocation2 + $0x59]]
    %s131 = sld [smem:[#allocation2 + $0x5a]]
    %s132 = sld [smem:[#allocation2 + $0x5b]]
    %s133 = sld [smem:[#allocation2 + $0x5c]]
    %s134 = sld [smem:[#allocation2 + $0x5d]]
    %s135 = sld [smem:[#allocation2 + $0x5e]]
    %s136 = sld [smem:[#allocation2 + $0x5f]]
    %v137 = vlaneseq
    %v138 = vshrl.u32 %v137, 7
    %vm139 = vcmp.eq.s32.totalorder %v138, 0
    %v140 = vsel %vm139, 1, 0
    %v141 = vcvt.s32.f32 %v140
    %v142 = vld [vmem:[#allocation6] sm:$0xff]
    %v143 = vld [vmem:[#allocation6 + $0x8] sm:$0xff]
    %v144 = vld [vmem:[#allocation6 + $0x10] sm:$0xff]
    %v145 = vld [vmem:[#allocation6 + $0x18] sm:$0xff]
    %v146 = vld [vmem:[#allocation6 + $0x20] sm:$0xff]
    %v147 = vld [vmem:[#allocation6 + $0x28] sm:$0xff]
    %v148 = vld [vmem:[#allocation6 + $0x30] sm:$0xff]
    %v149 = vld [vmem:[#allocation6 + $0x38] sm:$0xff]
    %v150 = vld [vmem:[#allocation6 + $0x40] sm:$0xff]
    %v151 = vld [vmem:[#allocation6 + $0x48] sm:$0xff]
    %v152 = vld [vmem:[#allocation6 + $0x50] sm:$0xff]
    %v153 = vld [vmem:[#allocation6 + $0x58] sm:$0xff]
    %v154 = vld [vmem:[#allocation6 + $0x60] sm:$0xff]
    %v155 = vld [vmem:[#allocation6 + $0x68] sm:$0xff]
    %v156 = vstv %s41
    %v157 = vmul.f32 %v156, %v142
    %v158 = vmul.f32 %v156, %v143
    %v159 = vstv %s49
    %v160 = vmul.f32 %v159, %v142
    %v161 = vmul.f32 %v159, %v143
    %v162 = vstv %s57
    %v163 = vmul.f32 %v162, %v142
    %v164 = vmul.f32 %v162, %v143
    %v165 = vstv %s65
    %v166 = vmul.f32 %v165, %v142
    %v167 = vmul.f32 %v165, %v143
    %v168 = vstv %s73
    %v169 = vmul.f32 %v168, %v142
    %v170 = vmul.f32 %v168, %v143
    %v171 = vstv %s81
    %v172 = vmul.f32 %v171, %v142
    %v173 = vmul.f32 %v171, %v143
    %v174 = vstv %s89
    %v175 = vmul.f32 %v174, %v142
    %v176 = vmul.f32 %v174, %v143
    %v177 = vstv %s97
    %v178 = vmul.f32 %v177, %v142
    %v179 = vmul.f32 %v177, %v143
    %v180 = vstv %s105
    %v181 = vmul.f32 %v180, %v142
    %v182 = vmul.f32 %v180, %v143
    %v183 = vstv %s113
    %v184 = vmul.f32 %v183, %v142
    %v185 = vmul.f32 %v183, %v143
    %v186 = vstv %s121
    %v187 = vmul.f32 %v186, %v142
    %v188 = vmul.f32 %v186, %v143
    %v189 = vstv %s129
    %v190 = vmul.f32 %v189, %v142
    %v191 = vmul.f32 %v189, %v143
    %v192 = vstv %s42
    %v193 = vmul.f32 %v192, %v144
    %v194 = vmul.f32 %v192, %v145
    %v195 = vadd.f32 %v157, %v193
    %v196 = vadd.f32 %v158, %v194
    %v197 = vstv %s50
    %v198 = vmul.f32 %v197, %v144
    %v199 = vmul.f32 %v197, %v145
    %v200 = vadd.f32 %v160, %v198
    %v201 = vadd.f32 %v161, %v199
    %v202 = vstv %s58
    %v203 = vmul.f32 %v202, %v144
    %v204 = vmul.f32 %v202, %v145
    %v205 = vadd.f32 %v163, %v203
    %v206 = vadd.f32 %v164, %v204
    %v207 = vstv %s66
    %v208 = vmul.f32 %v207, %v144
    %v209 = vmul.f32 %v207, %v145
    %v210 = vadd.f32 %v166, %v208
    %v211 = vadd.f32 %v167, %v209
    %v212 = vstv %s74
    %v213 = vmul.f32 %v212, %v144
    %v214 = vmul.f32 %v212, %v145
    %v215 = vadd.f32 %v169, %v213
    %v216 = vadd.f32 %v170, %v214
    %v217 = vstv %s82
    %v218 = vmul.f32 %v217, %v144
    %v219 = vmul.f32 %v217, %v145
    %v220 = vadd.f32 %v172, %v218
    %v221 = vadd.f32 %v173, %v219
    %v222 = vstv %s90
    %v223 = vmul.f32 %v222, %v144
    %v224 = vmul.f32 %v222, %v145
    %v225 = vadd.f32 %v175, %v223
    %v226 = vadd.f32 %v176, %v224
    %v227 = vstv %s98
    %v228 = vmul.f32 %v227, %v144
    %v229 = vmul.f32 %v227, %v145
    %v230 = vadd.f32 %v178, %v228
    %v231 = vadd.f32 %v179, %v229
    %v232 = vstv %s106
    %v233 = vmul.f32 %v232, %v144
    %v234 = vmul.f32 %v232, %v145
    %v235 = vadd.f32 %v181, %v233
    %v236 = vadd.f32 %v182, %v234
    %v237 = vstv %s114
    %v238 = vmul.f32 %v237, %v144
    %v239 = vmul.f32 %v237, %v145
    %v240 = vadd.f32 %v184, %v238
    %v241 = vadd.f32 %v185, %v239
    %v242 = vstv %s122
    %v243 = vmul.f32 %v242, %v144
    %v244 = vmul.f32 %v242, %v145
    %v245 = vadd.f32 %v187, %v243
    %v246 = vadd.f32 %v188, %v244
    %v247 = vstv %s130
    %v248 = vmul.f32 %v247, %v144
    %v249 = vmul.f32 %v247, %v145
    %v250 = vadd.f32 %v190, %v248
    %v251 = vadd.f32 %v191, %v249
    %v252 = vstv %s43
    %v253 = vmul.f32 %v252, %v146
    %v254 = vmul.f32 %v252, %v147
    %v255 = vadd.f32 %v195, %v253
    %v256 = vadd.f32 %v196, %v254
    %v257 = vstv %s51
    %v258 = vmul.f32 %v257, %v146
    %v259 = vmul.f32 %v257, %v147
    %v260 = vadd.f32 %v200, %v258
    %v261 = vadd.f32 %v201, %v259
    %v262 = vstv %s59
    %v263 = vmul.f32 %v262, %v146
    %v264 = vmul.f32 %v262, %v147
    %v265 = vadd.f32 %v205, %v263
    %v266 = vadd.f32 %v206, %v264
    %v267 = vstv %s67
    %v268 = vmul.f32 %v267, %v146
    %v269 = vmul.f32 %v267, %v147
    %v270 = vadd.f32 %v210, %v268
    %v271 = vadd.f32 %v211, %v269
    %v272 = vstv %s75
    %v273 = vmul.f32 %v272, %v146
    %v274 = vmul.f32 %v272, %v147
    %v275 = vadd.f32 %v215, %v273
    %v276 = vadd.f32 %v216, %v274
    %v277 = vstv %s83
    %v278 = vmul.f32 %v277, %v146
    %v279 = vmul.f32 %v277, %v147
    %v280 = vadd.f32 %v220, %v278
    %v281 = vadd.f32 %v221, %v279
    %v282 = vstv %s91
    %v283 = vmul.f32 %v282, %v146
    %v284 = vmul.f32 %v282, %v147
    %v285 = vadd.f32 %v225, %v283
    %v286 = vadd.f32 %v226, %v284
    %v287 = vstv %s99
    %v288 = vmul.f32 %v287, %v146
    %v289 = vmul.f32 %v287, %v147
    %v290 = vadd.f32 %v230, %v288
    %v291 = vadd.f32 %v231, %v289
    %v292 = vstv %s107
    %v293 = vmul.f32 %v292, %v146
    %v294 = vmul.f32 %v292, %v147
    %v295 = vadd.f32 %v235, %v293
    %v296 = vadd.f32 %v236, %v294
    %v297 = vstv %s115
    %v298 = vmul.f32 %v297, %v146
    %v299 = vmul.f32 %v297, %v147
    %v300 = vadd.f32 %v240, %v298
    %v301 = vadd.f32 %v241, %v299
    %v302 = vstv %s123
    %v303 = vmul.f32 %v302, %v146
    %v304 = vmul.f32 %v302, %v147
    %v305 = vadd.f32 %v245, %v303
    %v306 = vadd.f32 %v246, %v304
    %v307 = vstv %s131
    %v308 = vmul.f32 %v307, %v146
    %v309 = vmul.f32 %v307, %v147
    %v310 = vadd.f32 %v250, %v308
    %v311 = vadd.f32 %v251, %v309
    %v312 = vstv %s44
    %v313 = vmul.f32 %v312, %v148
    %v314 = vmul.f32 %v312, %v149
    %v315 = vadd.f32 %v255, %v313
    %v316 = vadd.f32 %v256, %v314
    %v317 = vstv %s52
    %v318 = vmul.f32 %v317, %v148
    %v319 = vmul.f32 %v317, %v149
    %v320 = vadd.f32 %v260, %v318
    %v321 = vadd.f32 %v261, %v319
    %v322 = vstv %s60
    %v323 = vmul.f32 %v322, %v148
    %v324 = vmul.f32 %v322, %v149
    %v325 = vadd.f32 %v265, %v323
    %v326 = vadd.f32 %v266, %v324
    %v327 = vstv %s68
    %v328 = vmul.f32 %v327, %v148
    %v329 = vmul.f32 %v327, %v149
    %v330 = vadd.f32 %v270, %v328
    %v331 = vadd.f32 %v271, %v329
    %v332 = vstv %s76
    %v333 = vmul.f32 %v332, %v148
    %v334 = vmul.f32 %v332, %v149
    %v335 = vadd.f32 %v275, %v333
    %v336 = vadd.f32 %v276, %v334
    %v337 = vstv %s84
    %v338 = vmul.f32 %v337, %v148
    %v339 = vmul.f32 %v337, %v149
    %v340 = vadd.f32 %v280, %v338
    %v341 = vadd.f32 %v281, %v339
    %v342 = vstv %s92
    %v343 = vmul.f32 %v342, %v148
    %v344 = vmul.f32 %v342, %v149
    %v345 = vadd.f32 %v285, %v343
    %v346 = vadd.f32 %v286, %v344
    %v347 = vstv %s100
    %v348 = vmul.f32 %v347, %v148
    %v349 = vmul.f32 %v347, %v149
    %v350 = vadd.f32 %v290, %v348
    %v351 = vadd.f32 %v291, %v349
    %v352 = vstv %s108
    %v353 = vmul.f32 %v352, %v148
    %v354 = vmul.f32 %v352, %v149
    %v355 = vadd.f32 %v295, %v353
    %v356 = vadd.f32 %v296, %v354
    %v357 = vstv %s116
    %v358 = vmul.f32 %v357, %v148
    %v359 = vmul.f32 %v357, %v149
    %v360 = vadd.f32 %v300, %v358
    %v361 = vadd.f32 %v301, %v359
    %v362 = vstv %s124
    %v363 = vmul.f32 %v362, %v148
    %v364 = vmul.f32 %v362, %v149
    %v365 = vadd.f32 %v305, %v363
    %v366 = vadd.f32 %v306, %v364
    %v367 = vstv %s132
    %v368 = vmul.f32 %v367, %v148
    %v369 = vmul.f32 %v367, %v149
    %v370 = vadd.f32 %v310, %v368
    %v371 = vadd.f32 %v311, %v369
    %v372 = vstv %s45
    %v373 = vmul.f32 %v372, %v150
    %v374 = vmul.f32 %v372, %v151
    %v375 = vadd.f32 %v315, %v373
    %v376 = vadd.f32 %v316, %v374
    %v377 = vstv %s53
    %v378 = vmul.f32 %v377, %v150
    %v379 = vmul.f32 %v377, %v151
    %v380 = vadd.f32 %v320, %v378
    %v381 = vadd.f32 %v321, %v379
    %v382 = vstv %s61
    %v383 = vmul.f32 %v382, %v150
    %v384 = vmul.f32 %v382, %v151
    %v385 = vadd.f32 %v325, %v383
    %v386 = vadd.f32 %v326, %v384
    %v387 = vstv %s69
    %v388 = vmul.f32 %v387, %v150
    %v389 = vmul.f32 %v387, %v151
    %v390 = vadd.f32 %v330, %v388
    %v391 = vadd.f32 %v331, %v389
    %v392 = vstv %s77
    %v393 = vmul.f32 %v392, %v150
    %v394 = vmul.f32 %v392, %v151
    %v395 = vadd.f32 %v335, %v393
    %v396 = vadd.f32 %v336, %v394
    %v397 = vstv %s85
    %v398 = vmul.f32 %v397, %v150
    %v399 = vmul.f32 %v397, %v151
    %v400 = vadd.f32 %v340, %v398
    %v401 = vadd.f32 %v341, %v399
    %v402 = vstv %s93
    %v403 = vmul.f32 %v402, %v150
    %v404 = vmul.f32 %v402, %v151
    %v405 = vadd.f32 %v345, %v403
    %v406 = vadd.f32 %v346, %v404
    %v407 = vstv %s101
    %v408 = vmul.f32 %v407, %v150
    %v409 = vmul.f32 %v407, %v151
    %v410 = vadd.f32 %v350, %v408
    %v411 = vadd.f32 %v351, %v409
    %v412 = vstv %s109
    %v413 = vmul.f32 %v412, %v150
    %v414 = vmul.f32 %v412, %v151
    %v415 = vadd.f32 %v355, %v413
    %v416 = vadd.f32 %v356, %v414
    %v417 = vstv %s117
    %v418 = vmul.f32 %v417, %v150
    %v419 = vmul.f32 %v417, %v151
    %v420 = vadd.f32 %v360, %v418
    %v421 = vadd.f32 %v361, %v419
    %v422 = vstv %s125
    %v423 = vmul.f32 %v422, %v150
    %v424 = vmul.f32 %v422, %v151
    %v425 = vadd.f32 %v365, %v423
    %v426 = vadd.f32 %v366, %v424
    %v427 = vstv %s133
    %v428 = vmul.f32 %v427, %v150
    %v429 = vmul.f32 %v427, %v151
    %v430 = vadd.f32 %v370, %v428
    %v431 = vadd.f32 %v371, %v429
    %v432 = vstv %s46
    %v433 = vmul.f32 %v432, %v152
    %v434 = vmul.f32 %v432, %v153
    %v435 = vadd.f32 %v375, %v433
    %v436 = vadd.f32 %v376, %v434
    %v437 = vstv %s54
    %v438 = vmul.f32 %v437, %v152
    %v439 = vmul.f32 %v437, %v153
    %v440 = vadd.f32 %v380, %v438
    %v441 = vadd.f32 %v381, %v439
    %v442 = vstv %s62
    %v443 = vmul.f32 %v442, %v152
    %v444 = vmul.f32 %v442, %v153
    %v445 = vadd.f32 %v385, %v443
    %v446 = vadd.f32 %v386, %v444
    %v447 = vstv %s70
    %v448 = vmul.f32 %v447, %v152
    %v449 = vmul.f32 %v447, %v153
    %v450 = vadd.f32 %v390, %v448
    %v451 = vadd.f32 %v391, %v449
    %v452 = vstv %s78
    %v453 = vmul.f32 %v452, %v152
    %v454 = vmul.f32 %v452, %v153
    %v455 = vadd.f32 %v395, %v453
    %v456 = vadd.f32 %v396, %v454
    %v457 = vstv %s86
    %v458 = vmul.f32 %v457, %v152
    %v459 = vmul.f32 %v457, %v153
    %v460 = vadd.f32 %v400, %v458
    %v461 = vadd.f32 %v401, %v459
    %v462 = vstv %s94
    %v463 = vmul.f32 %v462, %v152
    %v464 = vmul.f32 %v462, %v153
    %v465 = vadd.f32 %v405, %v463
    %v466 = vadd.f32 %v406, %v464
    %v467 = vstv %s102
    %v468 = vmul.f32 %v467, %v152
    %v469 = vmul.f32 %v467, %v153
    %v470 = vadd.f32 %v410, %v468
    %v471 = vadd.f32 %v411, %v469
    %v472 = vstv %s110
    %v473 = vmul.f32 %v472, %v152
    %v474 = vmul.f32 %v472, %v153
    %v475 = vadd.f32 %v415, %v473
    %v476 = vadd.f32 %v416, %v474
    %v477 = vstv %s118
    %v478 = vmul.f32 %v477, %v152
    %v479 = vmul.f32 %v477, %v153
    %v480 = vadd.f32 %v420, %v478
    %v481 = vadd.f32 %v421, %v479
    %v482 = vstv %s126
    %v483 = vmul.f32 %v482, %v152
    %v484 = vmul.f32 %v482, %v153
    %v485 = vadd.f32 %v425, %v483
    %v486 = vadd.f32 %v426, %v484
    %v487 = vstv %s134
    %v488 = vmul.f32 %v487, %v152
    %v489 = vmul.f32 %v487, %v153
    %v490 = vadd.f32 %v430, %v488
    %v491 = vadd.f32 %v431, %v489
    %v492 = vstv %s47
    %v493 = vmul.f32 %v492, %v154
    %v494 = vmul.f32 %v492, %v155
    %v495 = vadd.f32 %v435, %v493
    %v496 = vadd.f32 %v436, %v494
    %v497 = vstv %s55
    %v498 = vmul.f32 %v497, %v154
    %v499 = vmul.f32 %v497, %v155
    %v500 = vadd.f32 %v440, %v498
    %v501 = vadd.f32 %v441, %v499
    %v502 = vstv %s63
    %v503 = vmul.f32 %v502, %v154
    %v504 = vmul.f32 %v502, %v155
    %v505 = vadd.f32 %v445, %v503
    %v506 = vadd.f32 %v446, %v504
    %v507 = vstv %s71
    %v508 = vmul.f32 %v507, %v154
    %v509 = vmul.f32 %v507, %v155
    %v510 = vadd.f32 %v450, %v508
    %v511 = vadd.f32 %v451, %v509
    %v512 = vstv %s79
    %v513 = vmul.f32 %v512, %v154
    %v514 = vmul.f32 %v512, %v155
    %v515 = vadd.f32 %v455, %v513
    %v516 = vadd.f32 %v456, %v514
    %v517 = vstv %s87
    %v518 = vmul.f32 %v517, %v154
    %v519 = vmul.f32 %v517, %v155
    %v520 = vadd.f32 %v460, %v518
    %v521 = vadd.f32 %v461, %v519
    %v522 = vstv %s95
    %v523 = vmul.f32 %v522, %v154
    %v524 = vmul.f32 %v522, %v155
    %v525 = vadd.f32 %v465, %v523
    %v526 = vadd.f32 %v466, %v524
    %v527 = vstv %s103
    %v528 = vmul.f32 %v527, %v154
    %v529 = vmul.f32 %v527, %v155
    %v530 = vadd.f32 %v470, %v528
    %v531 = vadd.f32 %v471, %v529
    %v532 = vstv %s111
    %v533 = vmul.f32 %v532, %v154
    %v534 = vmul.f32 %v532, %v155
    %v535 = vadd.f32 %v475, %v533
    %v536 = vadd.f32 %v476, %v534
    %v537 = vstv %s119
    %v538 = vmul.f32 %v537, %v154
    %v539 = vmul.f32 %v537, %v155
    %v540 = vadd.f32 %v480, %v538
    %v541 = vadd.f32 %v481, %v539
    %v542 = vstv %s127
    %v543 = vmul.f32 %v542, %v154
    %v544 = vmul.f32 %v542, %v155
    %v545 = vadd.f32 %v485, %v543
    %v546 = vadd.f32 %v486, %v544
    %v547 = vstv %s135
    %v548 = vmul.f32 %v547, %v154
    %v549 = vmul.f32 %v547, %v155
    %v550 = vadd.f32 %v490, %v548
    %v551 = vadd.f32 %v491, %v549
    %v552 = vstv %s48
    %v553 = vmul.f32 %v552, %v141
    %v554 = vadd.f32 %v495, %v553
    %v555 = vadd.f32 %v496, %v553
    %v556 = vstv %s56
    %v557 = vmul.f32 %v556, %v141
    %v558 = vadd.f32 %v500, %v557
    %v559 = vadd.f32 %v501, %v557
    %v560 = vstv %s64
    %v561 = vmul.f32 %v560, %v141
    %v562 = vadd.f32 %v505, %v561
    %v563 = vadd.f32 %v506, %v561
    %v564 = vstv %s72
    %v565 = vmul.f32 %v564, %v141
    %v566 = vadd.f32 %v510, %v565
    %v567 = vadd.f32 %v511, %v565
    %v568 = vstv %s80
    %v569 = vmul.f32 %v568, %v141
    %v570 = vadd.f32 %v515, %v569
    %v571 = vadd.f32 %v516, %v569
    %v572 = vstv %s88
    %v573 = vmul.f32 %v572, %v141
    %v574 = vadd.f32 %v520, %v573
    %v575 = vadd.f32 %v521, %v573
    %v576 = vstv %s96
    %v577 = vmul.f32 %v576, %v141
    %v578 = vadd.f32 %v525, %v577
    %v579 = vadd.f32 %v526, %v577
    %v580 = vstv %s104
    %v581 = vmul.f32 %v580, %v141
    %v582 = vadd.f32 %v530, %v581
    %v583 = vadd.f32 %v531, %v581
    %v584 = vstv %s112
    %v585 = vmul.f32 %v584, %v141
    %v586 = vadd.f32 %v535, %v585
    %v587 = vadd.f32 %v536, %v585
    %v588 = vstv %s120
    %v589 = vmul.f32 %v588, %v141
    %v590 = vadd.f32 %v540, %v589
    %v591 = vadd.f32 %v541, %v589
    %v592 = vstv %s128
    %v593 = vmul.f32 %v592, %v141
    %v594 = vadd.f32 %v545, %v593
    %v595 = vadd.f32 %v546, %v593
    %v596 = vstv %s136
    %v597 = vmul.f32 %v596, %v141
    %v598 = vadd.f32 %v550, %v597
    %v599 = vadd.f32 %v551, %v597
    %v600 = vperm.slane %v554, 0
    %v601 = vperm.slane %v555, 0
    %v602 = vmul.f32 %v600, %v558
    %v603 = vmul.f32 %v601, %v559
    %v604 = vrot.slane %v558, 7
    %v605 = vrot.slane %v559, 7
    %v606 = vperm.slane %v554, 1
    %v607 = vperm.slane %v555, 1
    %v608 = vmul.f32 %v606, %v604
    %v609 = vmul.f32 %v607, %v605
    %v610 = vadd.f32 %v602, %v608
    %v611 = vadd.f32 %v603, %v609
    %v612 = vrot.slane %v558, 6
    %v613 = vrot.slane %v559, 6
    %v614 = vperm.slane %v554, 2
    %v615 = vperm.slane %v555, 2
    %v616 = vmul.f32 %v614, %v612
    %v617 = vmul.f32 %v615, %v613
    %v618 = vadd.f32 %v610, %v616
    %v619 = vadd.f32 %v611, %v617
    %v620 = vrot.slane %v558, 5
    %v621 = vrot.slane %v559, 5
    %v622 = vperm.slane %v554, 3
    %v623 = vperm.slane %v555, 3
    %v624 = vmul.f32 %v622, %v620
    %v625 = vmul.f32 %v623, %v621
    %v626 = vadd.f32 %v618, %v624
    %v627 = vadd.f32 %v619, %v625
    %v628 = vrot.slane %v558, 4
    %v629 = vrot.slane %v559, 4
    %v630 = vperm.slane %v554, 4
    %v631 = vperm.slane %v555, 4
    %v632 = vmul.f32 %v630, %v628
    %v633 = vmul.f32 %v631, %v629
    %v634 = vadd.f32 %v626, %v632
    %v635 = vadd.f32 %v627, %v633
    %v636 = vrot.slane %v558, 3
    %v637 = vrot.slane %v559, 3
    %v638 = vperm.slane %v554, 5
    %v639 = vperm.slane %v555, 5
    %v640 = vmul.f32 %v638, %v636
    %v641 = vmul.f32 %v639, %v637
    %v642 = vadd.f32 %v634, %v640
    %v643 = vadd.f32 %v635, %v641
    %v644 = vrot.slane %v558, 2
    %v645 = vrot.slane %v559, 2
    %v646 = vperm.slane %v554, 6
    %v647 = vperm.slane %v555, 6
    %v648 = vmul.f32 %v646, %v644
    %v649 = vmul.f32 %v647, %v645
    %v650 = vadd.f32 %v642, %v648
    %v651 = vadd.f32 %v643, %v649
    %v652 = vrot.slane %v558, 1
    %v653 = vrot.slane %v559, 1
    %v654 = vperm.slane %v554, 7
    %v655 = vperm.slane %v555, 7
    %v656 = vmul.f32 %v654, %v652
    %v657 = vmul.f32 %v655, %v653
    %v658 = vadd.f32 %v650, %v656
    %v659 = vadd.f32 %v651, %v657
    %v660 = vperm.slane %v562, 0
    %v661 = vperm.slane %v563, 0
    %v662 = vmul.f32 %v660, %v566
    %v663 = vmul.f32 %v661, %v567
    %v664 = vrot.slane %v566, 7
    %v665 = vrot.slane %v567, 7
    %v666 = vperm.slane %v562, 1
    %v667 = vperm.slane %v563, 1
    %v668 = vmul.f32 %v666, %v664
    %v669 = vmul.f32 %v667, %v665
    %v670 = vadd.f32 %v662, %v668
    %v671 = vadd.f32 %v663, %v669
    %v672 = vrot.slane %v566, 6
    %v673 = vrot.slane %v567, 6
    %v674 = vperm.slane %v562, 2
    %v675 = vperm.slane %v563, 2
    %v676 = vmul.f32 %v674, %v672
    %v677 = vmul.f32 %v675, %v673
    %v678 = vadd.f32 %v670, %v676
    %v679 = vadd.f32 %v671, %v677
    %v680 = vrot.slane %v566, 5
    %v681 = vrot.slane %v567, 5
    %v682 = vperm.slane %v562, 3
    %v683 = vperm.slane %v563, 3
    %v684 = vmul.f32 %v682, %v680
    %v685 = vmul.f32 %v683, %v681
    %v686 = vadd.f32 %v678, %v684
    %v687 = vadd.f32 %v679, %v685
    %v688 = vrot.slane %v566, 4
    %v689 = vrot.slane %v567, 4
    %v690 = vperm.slane %v562, 4
    %v691 = vperm.slane %v563, 4
    %v692 = vmul.f32 %v690, %v688
    %v693 = vmul.f32 %v691, %v689
    %v694 = vadd.f32 %v686, %v692
    %v695 = vadd.f32 %v687, %v693
    %v696 = vrot.slane %v566, 3
    %v697 = vrot.slane %v567, 3
    %v698 = vperm.slane %v562, 5
    %v699 = vperm.slane %v563, 5
    %v700 = vmul.f32 %v698, %v696
    %v701 = vmul.f32 %v699, %v697
    %v702 = vadd.f32 %v694, %v700
    %v703 = vadd.f32 %v695, %v701
    %v704 = vrot.slane %v566, 2
    %v705 = vrot.slane %v567, 2
    %v706 = vperm.slane %v562, 6
    %v707 = vperm.slane %v563, 6
    %v708 = vmul.f32 %v706, %v704
    %v709 = vmul.f32 %v707, %v705
    %v710 = vadd.f32 %v702, %v708
    %v711 = vadd.f32 %v703, %v709
    %v712 = vrot.slane %v566, 1
    %v713 = vrot.slane %v567, 1
    %v714 = vperm.slane %v562, 7
    %v715 = vperm.slane %v563, 7
    %v716 = vmul.f32 %v714, %v712
    %v717 = vmul.f32 %v715, %v713
    %v718 = vadd.f32 %v710, %v716
    %v719 = vadd.f32 %v711, %v717
    %v720 = vperm.slane %v658, 0
    %v721 = vperm.slane %v659, 0
    %v722 = vmul.f32 %v720, %v718
    %v723 = vmul.f32 %v721, %v719
    %v724 = vrot.slane %v718, 7
    %v725 = vrot.slane %v719, 7
    %v726 = vperm.slane %v658, 1
    %v727 = vperm.slane %v659, 1
    %v728 = vmul.f32 %v726, %v724
    %v729 = vmul.f32 %v727, %v725
    %v730 = vadd.f32 %v722, %v728
    %v731 = vadd.f32 %v723, %v729
    %v732 = vrot.slane %v718, 6
    %v733 = vrot.slane %v719, 6
    %v734 = vperm.slane %v658, 2
    %v735 = vperm.slane %v659, 2
    %v736 = vmul.f32 %v734, %v732
    %v737 = vmul.f32 %v735, %v733
    %v738 = vadd.f32 %v730, %v736
    %v739 = vadd.f32 %v731, %v737
    %v740 = vrot.slane %v718, 5
    %v741 = vrot.slane %v719, 5
    %v742 = vperm.slane %v658, 3
    %v743 = vperm.slane %v659, 3
    %v744 = vmul.f32 %v742, %v740
    %v745 = vmul.f32 %v743, %v741
    %v746 = vadd.f32 %v738, %v744
    %v747 = vadd.f32 %v739, %v745
    %v748 = vrot.slane %v718, 4
    %v749 = vrot.slane %v719, 4
    %v750 = vperm.slane %v658, 4
    %v751 = vperm.slane %v659, 4
    %v752 = vmul.f32 %v750, %v748
    %v753 = vmul.f32 %v751, %v749
    %v754 = vadd.f32 %v746, %v752
    %v755 = vadd.f32 %v747, %v753
    %v756 = vrot.slane %v718, 3
    %v757 = vrot.slane %v719, 3
    %v758 = vperm.slane %v658, 5
    %v759 = vperm.slane %v659, 5
    %v760 = vmul.f32 %v758, %v756
    %v761 = vmul.f32 %v759, %v757
    %v762 = vadd.f32 %v754, %v760
    %v763 = vadd.f32 %v755, %v761
    %v764 = vrot.slane %v718, 2
    %v765 = vrot.slane %v719, 2
    %v766 = vperm.slane %v658, 6
    %v767 = vperm.slane %v659, 6
    %v768 = vmul.f32 %v766, %v764
    %v769 = vmul.f32 %v767, %v765
    %v770 = vadd.f32 %v762, %v768
    %v771 = vadd.f32 %v763, %v769
    %v772 = vrot.slane %v718, 1
    %v773 = vrot.slane %v719, 1
    %v774 = vperm.slane %v658, 7
    %v775 = vperm.slane %v659, 7
    %v776 = vmul.f32 %v774, %v772
    %v777 = vmul.f32 %v775, %v773
    %v778 = vadd.f32 %v770, %v776
    %v779 = vadd.f32 %v771, %v777
    %v780 = vperm.slane %v570, 0
    %v781 = vperm.slane %v571, 0
    %v782 = vmul.f32 %v780, %v574
    %v783 = vmul.f32 %v781, %v575
    %v784 = vrot.slane %v574, 7
    %v785 = vrot.slane %v575, 7
    %v786 = vperm.slane %v570, 1
    %v787 = vperm.slane %v571, 1
    %v788 = vmul.f32 %v786, %v784
    %v789 = vmul.f32 %v787, %v785
    %v790 = vadd.f32 %v782, %v788
    %v791 = vadd.f32 %v783, %v789
    %v792 = vrot.slane %v574, 6
    %v793 = vrot.slane %v575, 6
    %v794 = vperm.slane %v570, 2
    %v795 = vperm.slane %v571, 2
    %v796 = vmul.f32 %v794, %v792
    %v797 = vmul.f32 %v795, %v793
    %v798 = vadd.f32 %v790, %v796
    %v799 = vadd.f32 %v791, %v797
    %v800 = vrot.slane %v574, 5
    %v801 = vrot.slane %v575, 5
    %v802 = vperm.slane %v570, 3
    %v803 = vperm.slane %v571, 3
    %v804 = vmul.f32 %v802, %v800
    %v805 = vmul.f32 %v803, %v801
    %v806 = vadd.f32 %v798, %v804
    %v807 = vadd.f32 %v799, %v805
    %v808 = vrot.slane %v574, 4
    %v809 = vrot.slane %v575, 4
    %v810 = vperm.slane %v570, 4
    %v811 = vperm.slane %v571, 4
    %v812 = vmul.f32 %v810, %v808
    %v813 = vmul.f32 %v811, %v809
    %v814 = vadd.f32 %v806, %v812
    %v815 = vadd.f32 %v807, %v813
    %v816 = vrot.slane %v574, 3
    %v817 = vrot.slane %v575, 3
    %v818 = vperm.slane %v570, 5
    %v819 = vperm.slane %v571, 5
    %v820 = vmul.f32 %v818, %v816
    %v821 = vmul.f32 %v819, %v817
    %v822 = vadd.f32 %v814, %v820
    %v823 = vadd.f32 %v815, %v821
    %v824 = vrot.slane %v574, 2
    %v825 = vrot.slane %v575, 2
    %v826 = vperm.slane %v570, 6
    %v827 = vperm.slane %v571, 6
    %v828 = vmul.f32 %v826, %v824
    %v829 = vmul.f32 %v827, %v825
    %v830 = vadd.f32 %v822, %v828
    %v831 = vadd.f32 %v823, %v829
    %v832 = vrot.slane %v574, 1
    %v833 = vrot.slane %v575, 1
    %v834 = vperm.slane %v570, 7
    %v835 = vperm.slane %v571, 7
    %v836 = vmul.f32 %v834, %v832
    %v837 = vmul.f32 %v835, %v833
    %v838 = vadd.f32 %v830, %v836
    %v839 = vadd.f32 %v831, %v837
    %v840 = vperm.slane %v778, 0
    %v841 = vperm.slane %v779, 0
    %v842 = vmul.f32 %v840, %v838
    %v843 = vmul.f32 %v841, %v839
    %v844 = vrot.slane %v838, 7
    %v845 = vrot.slane %v839, 7
    %v846 = vperm.slane %v778, 1
    %v847 = vperm.slane %v779, 1
    %v848 = vmul.f32 %v846, %v844
    %v849 = vmul.f32 %v847, %v845
    %v850 = vadd.f32 %v842, %v848
    %v851 = vadd.f32 %v843, %v849
    %v852 = vrot.slane %v838, 6
    %v853 = vrot.slane %v839, 6
    %v854 = vperm.slane %v778, 2
    %v855 = vperm.slane %v779, 2
    %v856 = vmul.f32 %v854, %v852
    %v857 = vmul.f32 %v855, %v853
    %v858 = vadd.f32 %v850, %v856
    %v859 = vadd.f32 %v851, %v857
    %v860 = vrot.slane %v838, 5
    %v861 = vrot.slane %v839, 5
    %v862 = vperm.slane %v778, 3
    %v863 = vperm.slane %v779, 3
    %v864 = vmul.f32 %v862, %v860
    %v865 = vmul.f32 %v863, %v861
    %v866 = vadd.f32 %v858, %v864
    %v867 = vadd.f32 %v859, %v865
    %v868 = vrot.slane %v838, 4
    %v869 = vrot.slane %v839, 4
    %v870 = vperm.slane %v778, 4
    %v871 = vperm.slane %v779, 4
    %v872 = vmul.f32 %v870, %v868
    %v873 = vmul.f32 %v871, %v869
    %v874 = vadd.f32 %v866, %v872
    %v875 = vadd.f32 %v867, %v873
    %v876 = vrot.slane %v838, 3
    %v877 = vrot.slane %v839, 3
    %v878 = vperm.slane %v778, 5
    %v879 = vperm.slane %v779, 5
    %v880 = vmul.f32 %v878, %v876
    %v881 = vmul.f32 %v879, %v877
    %v882 = vadd.f32 %v874, %v880
    %v883 = vadd.f32 %v875, %v881
    %v884 = vrot.slane %v838, 2
    %v885 = vrot.slane %v839, 2
    %v886 = vperm.slane %v778, 6
    %v887 = vperm.slane %v779, 6
    %v888 = vmul.f32 %v886, %v884
    %v889 = vmul.f32 %v887, %v885
    %v890 = vadd.f32 %v882, %v888
    %v891 = vadd.f32 %v883, %v889
    %v892 = vrot.slane %v838, 1
    %v893 = vrot.slane %v839, 1
    %v894 = vperm.slane %v778, 7
    %v895 = vperm.slane %v779, 7
    %v896 = vmul.f32 %v894, %v892
    %v897 = vmul.f32 %v895, %v893
    %v898 = vadd.f32 %v890, %v896
    %v899 = vadd.f32 %v891, %v897
    %v900 = vperm.slane %v578, 0
    %v901 = vperm.slane %v579, 0
    %v902 = vmul.f32 %v900, %v582
    %v903 = vmul.f32 %v901, %v583
    %v904 = vrot.slane %v582, 7
    %v905 = vrot.slane %v583, 7
    %v906 = vperm.slane %v578, 1
    %v907 = vperm.slane %v579, 1
    %v908 = vmul.f32 %v906, %v904
    %v909 = vmul.f32 %v907, %v905
    %v910 = vadd.f32 %v902, %v908
    %v911 = vadd.f32 %v903, %v909
    %v912 = vrot.slane %v582, 6
    %v913 = vrot.slane %v583, 6
    %v914 = vperm.slane %v578, 2
    %v915 = vperm.slane %v579, 2
    %v916 = vmul.f32 %v914, %v912
    %v917 = vmul.f32 %v915, %v913
    %v918 = vadd.f32 %v910, %v916
    %v919 = vadd.f32 %v911, %v917
    %v920 = vrot.slane %v582, 5
    %v921 = vrot.slane %v583, 5
    %v922 = vperm.slane %v578, 3
    %v923 = vperm.slane %v579, 3
    %v924 = vmul.f32 %v922, %v920
    %v925 = vmul.f32 %v923, %v921
    %v926 = vadd.f32 %v918, %v924
    %v927 = vadd.f32 %v919, %v925
    %v928 = vrot.slane %v582, 4
    %v929 = vrot.slane %v583, 4
    %v930 = vperm.slane %v578, 4
    %v931 = vperm.slane %v579, 4
    %v932 = vmul.f32 %v930, %v928
    %v933 = vmul.f32 %v931, %v929
    %v934 = vadd.f32 %v926, %v932
    %v935 = vadd.f32 %v927, %v933
    %v936 = vrot.slane %v582, 3
    %v937 = vrot.slane %v583, 3
    %v938 = vperm.slane %v578, 5
    %v939 = vperm.slane %v579, 5
    %v940 = vmul.f32 %v938, %v936
    %v941 = vmul.f32 %v939, %v937
    %v942 = vadd.f32 %v934, %v940
    %v943 = vadd.f32 %v935, %v941
    %v944 = vrot.slane %v582, 2
    %v945 = vrot.slane %v583, 2
    %v946 = vperm.slane %v578, 6
    %v947 = vperm.slane %v579, 6
    %v948 = vmul.f32 %v946, %v944
    %v949 = vmul.f32 %v947, %v945
    %v950 = vadd.f32 %v942, %v948
    %v951 = vadd.f32 %v943, %v949
    %v952 = vrot.slane %v582, 1
    %v953 = vrot.slane %v583, 1
    %v954 = vperm.slane %v578, 7
    %v955 = vperm.slane %v579, 7
    %v956 = vmul.f32 %v954, %v952
    %v957 = vmul.f32 %v955, %v953
    %v958 = vadd.f32 %v950, %v956
    %v959 = vadd.f32 %v951, %v957
    %v960 = vperm.slane %v586, 0
    %v961 = vperm.slane %v587, 0
    %v962 = vmul.f32 %v960, %v590
    %v963 = vmul.f32 %v961, %v591
    %v964 = vrot.slane %v590, 7
    %v965 = vrot.slane %v591, 7
    %v966 = vperm.slane %v586, 1
    %v967 = vperm.slane %v587, 1
    %v968 = vmul.f32 %v966, %v964
    %v969 = vmul.f32 %v967, %v965
    %v970 = vadd.f32 %v962, %v968
    %v971 = vadd.f32 %v963, %v969
    %v972 = vrot.slane %v590, 6
    %v973 = vrot.slane %v591, 6
    %v974 = vperm.slane %v586, 2
    %v975 = vperm.slane %v587, 2
    %v976 = vmul.f32 %v974, %v972
    %v977 = vmul.f32 %v975, %v973
    %v978 = vadd.f32 %v970, %v976
    %v979 = vadd.f32 %v971, %v977
    %v980 = vrot.slane %v590, 5
    %v981 = vrot.slane %v591, 5
    %v982 = vperm.slane %v586, 3
    %v983 = vperm.slane %v587, 3
    %v984 = vmul.f32 %v982, %v980
    %v985 = vmul.f32 %v983, %v981
    %v986 = vadd.f32 %v978, %v984
    %v987 = vadd.f32 %v979, %v985
    %v988 = vrot.slane %v590, 4
    %v989 = vrot.slane %v591, 4
    %v990 = vperm.slane %v586, 4
    %v991 = vperm.slane %v587, 4
    %v992 = vmul.f32 %v990, %v988
    %v993 = vmul.f32 %v991, %v989
    %v994 = vadd.f32 %v986, %v992
    %v995 = vadd.f32 %v987, %v993
    %v996 = vrot.slane %v590, 3
    %v997 = vrot.slane %v591, 3
    %v998 = vperm.slane %v586, 5
    %v999 = vperm.slane %v587, 5
    %v1000 = vmul.f32 %v998, %v996
    %v1001 = vmul.f32 %v999, %v997
    %v1002 = vadd.f32 %v994, %v1000
    %v1003 = vadd.f32 %v995, %v1001
    %v1004 = vrot.slane %v590, 2
    %v1005 = vrot.slane %v591, 2
    %v1006 = vperm.slane %v586, 6
    %v1007 = vperm.slane %v587, 6
    %v1008 = vmul.f32 %v1006, %v1004
    %v1009 = vmul.f32 %v1007, %v1005
    %v1010 = vadd.f32 %v1002, %v1008
    %v1011 = vadd.f32 %v1003, %v1009
    %v1012 = vrot.slane %v590, 1
    %v1013 = vrot.slane %v591, 1
    %v1014 = vperm.slane %v586, 7
    %v1015 = vperm.slane %v587, 7
    %v1016 = vmul.f32 %v1014, %v1012
    %v1017 = vmul.f32 %v1015, %v1013
    %v1018 = vadd.f32 %v1010, %v1016
    %v1019 = vadd.f32 %v1011, %v1017
    %v1020 = vperm.slane %v958, 0
    %v1021 = vperm.slane %v959, 0
    %v1022 = vmul.f32 %v1020, %v1018
    %v1023 = vmul.f32 %v1021, %v1019
    %v1024 = vrot.slane %v1018, 7
    %v1025 = vrot.slane %v1019, 7
    %v1026 = vperm.slane %v958, 1
    %v1027 = vperm.slane %v959, 1
    %v1028 = vmul.f32 %v1026, %v1024
    %v1029 = vmul.f32 %v1027, %v1025
    %v1030 = vadd.f32 %v1022, %v1028
    %v1031 = vadd.f32 %v1023, %v1029
    %v1032 = vrot.slane %v1018, 6
    %v1033 = vrot.slane %v1019, 6
    %v1034 = vperm.slane %v958, 2
    %v1035 = vperm.slane %v959, 2
    %v1036 = vmul.f32 %v1034, %v1032
    %v1037 = vmul.f32 %v1035, %v1033
    %v1038 = vadd.f32 %v1030, %v1036
    %v1039 = vadd.f32 %v1031, %v1037
    %v1040 = vrot.slane %v1018, 5
    %v1041 = vrot.slane %v1019, 5
    %v1042 = vperm.slane %v958, 3
    %v1043 = vperm.slane %v959, 3
    %v1044 = vmul.f32 %v1042, %v1040
    %v1045 = vmul.f32 %v1043, %v1041
    %v1046 = vadd.f32 %v1038, %v1044
    %v1047 = vadd.f32 %v1039, %v1045
    %v1048 = vrot.slane %v1018, 4
    %v1049 = vrot.slane %v1019, 4
    %v1050 = vperm.slane %v958, 4
    %v1051 = vperm.slane %v959, 4
    %v1052 = vmul.f32 %v1050, %v1048
    %v1053 = vmul.f32 %v1051, %v1049
    %v1054 = vadd.f32 %v1046, %v1052
    %v1055 = vadd.f32 %v1047, %v1053
    %v1056 = vrot.slane %v1018, 3
    %v1057 = vrot.slane %v1019, 3
    %v1058 = vperm.slane %v958, 5
    %v1059 = vperm.slane %v959, 5
    %v1060 = vmul.f32 %v1058, %v1056
    %v1061 = vmul.f32 %v1059, %v1057
    %v1062 = vadd.f32 %v1054, %v1060
    %v1063 = vadd.f32 %v1055, %v1061
    %v1064 = vrot.slane %v1018, 2
    %v1065 = vrot.slane %v1019, 2
    %v1066 = vperm.slane %v958, 6
    %v1067 = vperm.slane %v959, 6
    %v1068 = vmul.f32 %v1066, %v1064
    %v1069 = vmul.f32 %v1067, %v1065
    %v1070 = vadd.f32 %v1062, %v1068
    %v1071 = vadd.f32 %v1063, %v1069
    %v1072 = vrot.slane %v1018, 1
    %v1073 = vrot.slane %v1019, 1
    %v1074 = vperm.slane %v958, 7
    %v1075 = vperm.slane %v959, 7
    %v1076 = vmul.f32 %v1074, %v1072
    %v1077 = vmul.f32 %v1075, %v1073
    %v1078 = vadd.f32 %v1070, %v1076
    %v1079 = vadd.f32 %v1071, %v1077
    %v1080 = vperm.slane %v594, 0
    %v1081 = vperm.slane %v595, 0
    %v1082 = vmul.f32 %v1080, %v598
    %v1083 = vmul.f32 %v1081, %v599
    %v1084 = vrot.slane %v598, 7
    %v1085 = vrot.slane %v599, 7
    %v1086 = vperm.slane %v594, 1
    %v1087 = vperm.slane %v595, 1
    %v1088 = vmul.f32 %v1086, %v1084
    %v1089 = vmul.f32 %v1087, %v1085
    %v1090 = vadd.f32 %v1082, %v1088
    %v1091 = vadd.f32 %v1083, %v1089
    %v1092 = vrot.slane %v598, 6
    %v1093 = vrot.slane %v599, 6
    %v1094 = vperm.slane %v594, 2
    %v1095 = vperm.slane %v595, 2
    %v1096 = vmul.f32 %v1094, %v1092
    %v1097 = vmul.f32 %v1095, %v1093
    %v1098 = vadd.f32 %v1090, %v1096
    %v1099 = vadd.f32 %v1091, %v1097
    %v1100 = vrot.slane %v598, 5
    %v1101 = vrot.slane %v599, 5
    %v1102 = vperm.slane %v594, 3
    %v1103 = vperm.slane %v595, 3
    %v1104 = vmul.f32 %v1102, %v1100
    %v1105 = vmul.f32 %v1103, %v1101
    %v1106 = vadd.f32 %v1098, %v1104
    %v1107 = vadd.f32 %v1099, %v1105
    %v1108 = vrot.slane %v598, 4
    %v1109 = vrot.slane %v599, 4
    %v1110 = vperm.slane %v594, 4
    %v1111 = vperm.slane %v595, 4
    %v1112 = vmul.f32 %v1110, %v1108
    %v1113 = vmul.f32 %v1111, %v1109
    %v1114 = vadd.f32 %v1106, %v1112
    %v1115 = vadd.f32 %v1107, %v1113
    %v1116 = vrot.slane %v598, 3
    %v1117 = vrot.slane %v599, 3
    %v1118 = vperm.slane %v594, 5
    %v1119 = vperm.slane %v595, 5
    %v1120 = vmul.f32 %v1118, %v1116
    %v1121 = vmul.f32 %v1119, %v1117
    %v1122 = vadd.f32 %v1114, %v1120
    %v1123 = vadd.f32 %v1115, %v1121
    %v1124 = vrot.slane %v598, 2
    %v1125 = vrot.slane %v599, 2
    %v1126 = vperm.slane %v594, 6
    %v1127 = vperm.slane %v595, 6
    %v1128 = vmul.f32 %v1126, %v1124
    %v1129 = vmul.f32 %v1127, %v1125
    %v1130 = vadd.f32 %v1122, %v1128
    %v1131 = vadd.f32 %v1123, %v1129
    %v1132 = vrot.slane %v598, 1
    %v1133 = vrot.slane %v599, 1
    %v1134 = vperm.slane %v594, 7
    %v1135 = vperm.slane %v595, 7
    %v1136 = vmul.f32 %v1134, %v1132
    %v1137 = vmul.f32 %v1135, %v1133
    %v1138 = vadd.f32 %v1130, %v1136
    %v1139 = vadd.f32 %v1131, %v1137
    %v1140 = vperm.slane %v1078, 0
    %v1141 = vperm.slane %v1079, 0
    %v1142 = vmul.f32 %v1140, %v1138
    %v1143 = vmul.f32 %v1141, %v1139
    %v1144 = vrot.slane %v1138, 7
    %v1145 = vrot.slane %v1139, 7
    %v1146 = vperm.slane %v1078, 1
    %v1147 = vperm.slane %v1079, 1
    %v1148 = vmul.f32 %v1146, %v1144
    %v1149 = vmul.f32 %v1147, %v1145
    %v1150 = vadd.f32 %v1142, %v1148
    %v1151 = vadd.f32 %v1143, %v1149
    %v1152 = vrot.slane %v1138, 6
    %v1153 = vrot.slane %v1139, 6
    %v1154 = vperm.slane %v1078, 2
    %v1155 = vperm.slane %v1079, 2
    %v1156 = vmul.f32 %v1154, %v1152
    %v1157 = vmul.f32 %v1155, %v1153
    %v1158 = vadd.f32 %v1150, %v1156
    %v1159 = vadd.f32 %v1151, %v1157
    %v1160 = vrot.slane %v1138, 5
    %v1161 = vrot.slane %v1139, 5
    %v1162 = vperm.slane %v1078, 3
    %v1163 = vperm.slane %v1079, 3
    %v1164 = vmul.f32 %v1162, %v1160
    %v1165 = vmul.f32 %v1163, %v1161
    %v1166 = vadd.f32 %v1158, %v1164
    %v1167 = vadd.f32 %v1159, %v1165
    %v1168 = vrot.slane %v1138, 4
    %v1169 = vrot.slane %v1139, 4
    %v1170 = vperm.slane %v1078, 4
    %v1171 = vperm.slane %v1079, 4
    %v1172 = vmul.f32 %v1170, %v1168
    %v1173 = vmul.f32 %v1171, %v1169
    %v1174 = vadd.f32 %v1166, %v1172
    %v1175 = vadd.f32 %v1167, %v1173
    %v1176 = vrot.slane %v1138, 3
    %v1177 = vrot.slane %v1139, 3
    %v1178 = vperm.slane %v1078, 5
    %v1179 = vperm.slane %v1079, 5
    %v1180 = vmul.f32 %v1178, %v1176
    %v1181 = vmul.f32 %v1179, %v1177
    %v1182 = vadd.f32 %v1174, %v1180
    %v1183 = vadd.f32 %v1175, %v1181
    %v1184 = vrot.slane %v1138, 2
    %v1185 = vrot.slane %v1139, 2
    %v1186 = vperm.slane %v1078, 6
    %v1187 = vperm.slane %v1079, 6
    %v1188 = vmul.f32 %v1186, %v1184
    %v1189 = vmul.f32 %v1187, %v1185
    %v1190 = vadd.f32 %v1182, %v1188
    %v1191 = vadd.f32 %v1183, %v1189
    %v1192 = vrot.slane %v1138, 1
    %v1193 = vrot.slane %v1139, 1
    %v1194 = vperm.slane %v1078, 7
    %v1195 = vperm.slane %v1079, 7
    %v1196 = vmul.f32 %v1194, %v1192
    %v1197 = vmul.f32 %v1195, %v1193
    %v1198 = vadd.f32 %v1190, %v1196
    %v1199 = vadd.f32 %v1191, %v1197
    %v1200 = vperm.slane %v1198, 0
    %v1201 = vperm.slane %v1199, 0
    %v1202 = vmul.f32 %v1200, %v898
    %v1203 = vmul.f32 %v1201, %v899
    %v1204 = vrot.slane %v898, 1
    %v1205 = vrot.slane %v899, 1
    %v1206 = vperm.slane %v1198, 1
    %v1207 = vperm.slane %v1199, 1
    %v1208 = vmul.f32 %v1206, %v1204
    %v1209 = vmul.f32 %v1207, %v1205
    %v1210 = vadd.f32 %v1202, %v1208
    %v1211 = vadd.f32 %v1203, %v1209
    %v1212 = vrot.slane %v898, 2
    %v1213 = vrot.slane %v899, 2
    %v1214 = vperm.slane %v1198, 2
    %v1215 = vperm.slane %v1199, 2
    %v1216 = vmul.f32 %v1214, %v1212
    %v1217 = vmul.f32 %v1215, %v1213
    %v1218 = vadd.f32 %v1210, %v1216
    %v1219 = vadd.f32 %v1211, %v1217
    %v1220 = vrot.slane %v898, 3
    %v1221 = vrot.slane %v899, 3
    %v1222 = vperm.slane %v1198, 3
    %v1223 = vperm.slane %v1199, 3
    %v1224 = vmul.f32 %v1222, %v1220
    %v1225 = vmul.f32 %v1223, %v1221
    %v1226 = vadd.f32 %v1218, %v1224
    %v1227 = vadd.f32 %v1219, %v1225
    %v1228 = vrot.slane %v898, 4
    %v1229 = vrot.slane %v899, 4
    %v1230 = vperm.slane %v1198, 4
    %v1231 = vperm.slane %v1199, 4
    %v1232 = vmul.f32 %v1230, %v1228
    %v1233 = vmul.f32 %v1231, %v1229
    %v1234 = vadd.f32 %v1226, %v1232
    %v1235 = vadd.f32 %v1227, %v1233
    %v1236 = vrot.slane %v898, 5
    %v1237 = vrot.slane %v899, 5
    %v1238 = vperm.slane %v1198, 5
    %v1239 = vperm.slane %v1199, 5
    %v1240 = vmul.f32 %v1238, %v1236
    %v1241 = vmul.f32 %v1239, %v1237
    %v1242 = vadd.f32 %v1234, %v1240
    %v1243 = vadd.f32 %v1235, %v1241
    %v1244 = vrot.slane %v898, 6
    %v1245 = vrot.slane %v899, 6
    %v1246 = vperm.slane %v1198, 6
    %v1247 = vperm.slane %v1199, 6
    %v1248 = vmul.f32 %v1246, %v1244
    %v1249 = vmul.f32 %v1247, %v1245
    %v1250 = vadd.f32 %v1242, %v1248
    %v1251 = vadd.f32 %v1243, %v1249
    %v1252 = vrot.slane %v898, 7
    %v1253 = vrot.slane %v899, 7
    %v1254 = vperm.slane %v1198, 7
    %v1255 = vperm.slane %v1199, 7
    %v1256 = vmul.f32 %v1254, %v1252
    %v1257 = vmul.f32 %v1255, %v1253
    %v1258 = vadd.f32 %v1250, %v1256
    %v1259 = vadd.f32 %v1251, %v1257
    %1260 = vst [vmem:[#allocation7] sm:$0xff] %v1258
    %1261 = vst [vmem:[#allocation7 + $0x8] sm:$0xff] %v1259
    // Predicated region
    $region18: #{tpu_custom_call.1} parent=1 // pred_check
      _
    $region19: #{tpu_custom_call.1} parent=1 // pred_check_branch
      %1263 = sbr.rel (0) target = $region21
    $region20: #{tpu_custom_call.1} parent=1 // pred_region
      %1265 = vsyncadd [#allocation4], 0
      %s1267 = sshll.u32 [#allocation7], 4
      %s1268 = int_to_ptr.vmem [resolvable:$true] %s1267
      %s1269 = sshll.u32 %s2, 4
      %s1270 = int_to_ptr.hbm [resolvable:$true] %s1269
      %1272 = dma.vmem_to_hbm [thread:$0]  %s1268, 256, %s1270, [#allocation4]
    $region21: #{tpu_custom_call.1} parent=1 // pred_fallthru
      _
    // Predicated region
    $region22: #{tpu_custom_call.1} parent=1 // pred_check
      _
    $region23: #{tpu_custom_call.1} parent=1 // pred_check_branch
      %1274 = sbr.rel (0) target = $region25
    $region24: #{tpu_custom_call.1} parent=1 // pred_region
      %1276 = dma.done [#allocation4], 256
    $region25: #{tpu_custom_call.1} parent=1 // pred_fallthru
      _
    %1277 = vsyncpa [#allocation3], 1
    %1278 = vsyncpa [#allocation4], 1
    %1279 = vsyncpa [#allocation5], 1

</llo_original>
